<compile_context>
chip_gen: v5e
topology: v5e:2x2
jax: 0.10.0
libtpu: 0.0.40
codegen_flags: <defaults>
</compile_context>

<pallas_src>
import math

import jax
import jax.numpy as jnp
from jax.experimental import pallas as pl
from jax.experimental.pallas import tpu as pltpu

HIDDEN = 128
INPUT = 128            # input_size == hidden_size -> proj_layer is nn.Identity()
NUM_HEADS = 4
HEAD_DIM = HIDDEN // NUM_HEADS
LN_EPS = 1e-5


def attn_rnn_seq_kernel(h0_ref, x_ref, mseg_ref, whq_ref, wo_ref, wg2_ref,
                        bias_ref, out_ref, h_vmem):
    t = pl.program_id(1)

    # Load initial hidden state into the VMEM carry at the first timestep of
    # each batch tile (the time axis is the innermost, "arbitrary" grid axis).
    @pl.when(t == 0)
    def _():
        h_vmem[...] = h0_ref[...]

    h = h_vmem[...]                      # (tm, H) f32, carried across t
    xp = x_ref[0]                        # (tm, H) f32; proj_layer == Identity

    # Packed per-feature vectors (one (8,128) tile): rows = bq*scale, bo, bg,
    # gamma, beta, padding.
    bq = bias_ref[0:1, :]
    bo = bias_ref[1:2, :]
    bg = bias_ref[2:3, :]
    gamma = bias_ref[3:4, :]
    beta = bias_ref[4:5, :]

    h_bf = h.astype(jnp.bfloat16)
    mseg = mseg_ref[...]                 # (H, H) bf16 block-diag same-head ones

    # Fused matmul: LHS = h against [wq_t * (1/sqrt(d)) | wg1_t] -> (tm, 2H).
    hq = jnp.dot(h_bf, whq_ref[...], preferred_element_type=jnp.float32)
    q = hq[:, :HIDDEN] + bq              # already pre-scaled by 1/sqrt(head_dim)
    gate_h = hq[:, HIDDEN:]              # h-part of the update-gate pre-activation

    # Per-head scores for context positions 0 (h), 1 (x), 3 (h*x); position 2
    # (h+x) follows by linearity: dot(q*(h+x), M) == dot(q*h, M) + dot(q*x, M).
    qc0 = q * h
    qc1 = q * xp
    qc3 = qc0 * xp                       # q * (h*x)
    s0 = jnp.dot(qc0.astype(jnp.bfloat16), mseg, preferred_element_type=jnp.float32)
    s1 = jnp.dot(qc1.astype(jnp.bfloat16), mseg, preferred_element_type=jnp.float32)
    s3 = jnp.dot(qc3.astype(jnp.bfloat16), mseg, preferred_element_type=jnp.float32)
    s2 = s0 + s1

    # softmax over the 4 context positions (elementwise, numerically stable)
    m = jnp.maximum(jnp.maximum(s0, s1), jnp.maximum(s2, s3))
    e0 = jnp.exp(s0 - m)
    e1 = jnp.exp(s1 - m)
    e2 = jnp.exp(s2 - m)
    e3 = jnp.exp(s3 - m)
    inv_den = pl.reciprocal(e0 + e1 + e2 + e3, approx=True)
    # Weighted context sum without materializing c2 = h+x or c3 = h*x:
    #   e0*h + e1*x + e2*(h+x) + e3*(h*x) = h*(e0 + e2 + e3*x) + x*(e1 + e2)
    attn = (h * (e0 + e2 + e3 * xp) + xp * (e1 + e2)) * inv_den

    # output projection
    attn_out = jnp.dot(attn.astype(jnp.bfloat16), wo_ref[...],
                       preferred_element_type=jnp.float32) + bo

    # exact GELU (PyTorch F.gelu default uses erf)
    g = 0.5 * attn_out * (1.0 + jax.lax.erf(attn_out * (1.0 / math.sqrt(2.0))))

    # update gate: sigmoid(Linear(concat([h_prev, gelu(attn_out)])))
    gate_pre = (gate_h
                + jnp.dot(g.astype(jnp.bfloat16), wg2_ref[...],
                          preferred_element_type=jnp.float32)
                + bg)
    gate = jax.nn.sigmoid(gate_pre)

    # layer norm of (gelu(attn_out) + h_prev), biased variance, eps = 1e-5
    y = g + h
    mean = jnp.mean(y, axis=-1, keepdims=True)
    yc = y - mean
    var = jnp.mean(yc * yc, axis=-1, keepdims=True)
    cand = yc * jax.lax.rsqrt(var + LN_EPS) * gamma + beta

    h_new = gate * cand + (1.0 - gate) * h

    h_vmem[...] = h_new                  # carry to next timestep
    out_ref[0] = h_new                   # emit this timestep's hidden state


def attn_rnn_sequence(h0, x_seq, params, *, batch_tile=256):
    """Run the cell over T timesteps in one pallas_call.

    h0:    (B, H) f32
    x_seq: (T, B, H) f32
    returns (T, B, H) f32 hidden states.

    Note (per-generation tiling): on v5e prefer batch_tile<=128 (single vst
    slot, spill-sensitive); on v6e/v7x up to 512 is fine. For B <= batch_tile
    the full batch is one tile.
    """
    T, B, H = x_seq.shape
    assert H == HIDDEN and h0.shape == (B, HIDDEN)
    assert batch_tile % 8 == 0

    tm = B if B <= batch_tile else batch_tile
    grid = (pl.cdiv(B, tm), T)

    return pl.pallas_call(
        attn_rnn_seq_kernel,
        out_shape=jax.ShapeDtypeStruct((T, B, H), jnp.float32),
        grid=grid,
        in_specs=[
            pl.BlockSpec((tm, H), lambda i, t: (i, 0)),        # h0 (resident per tile)
            pl.BlockSpec((1, tm, H), lambda i, t: (t, i, 0)),  # x_seq (per step)
            pl.BlockSpec((H, H), lambda i, t: (0, 0)),          # mseg (resident)
            pl.BlockSpec((H, 2 * H), lambda i, t: (0, 0)),      # [wq_t*scale | wg1_t]
            pl.BlockSpec((H, H), lambda i, t: (0, 0)),          # wo_t
            pl.BlockSpec((H, H), lambda i, t: (0, 0)),          # wg2_t
            pl.BlockSpec((8, H), lambda i, t: (0, 0)),          # packed biases/LN params
        ],
        out_specs=pl.BlockSpec((1, tm, H), lambda i, t: (t, i, 0)),
        scratch_shapes=[pltpu.VMEM((tm, H), jnp.float32)],       # h carry
        compiler_params=pltpu.CompilerParams(
            dimension_semantics=("parallel", "arbitrary")),
    )(h0, x_seq,
      params["mseg"], params["whq_t"], params["wo_t"], params["wg2_t"],
      params["bias_pack"])


def attn_rnn_cell(h_prev, x, params, *, batch_tile=256):
    """Single-step forward, matching AttnRNNCell.forward(h_prev, x)."""
    return attn_rnn_sequence(h_prev, x[None, ...], params,
                             batch_tile=batch_tile)[0]


def init_params(key):
    ks = jax.random.split(key, 6)
    s = 0.1
    wq = jax.random.normal(ks[0], (HIDDEN, HIDDEN), jnp.float32) * s     # q_proj (out, in)
    bq = jax.random.normal(ks[1], (HIDDEN,), jnp.float32) * s
    wo = jax.random.normal(ks[2], (HIDDEN, HIDDEN), jnp.float32) * s     # out_proj (out, in)
    bo = jax.random.normal(ks[3], (HIDDEN,), jnp.float32) * s
    wg = jax.random.normal(ks[4], (HIDDEN, 2 * HIDDEN), jnp.float32) * s  # gate (out, 2H)
    bg = jax.random.normal(ks[5], (HIDDEN,), jnp.float32) * s
    gamma = jnp.ones((HIDDEN,), jnp.float32)
    beta = jnp.zeros((HIDDEN,), jnp.float32)

    # Fold the attention scale into the q projection in f32 (exact).
    scale = 1.0 / math.sqrt(HEAD_DIM)
    wq_t_scaled = wq.T * scale          # (in, out)
    bq_scaled = bq * scale
    wg1_t = wg[:, :HIDDEN].T            # acts on h_prev
    wg2_t = wg[:, HIDDEN:].T            # acts on gelu(attn_out)
    whq_t = jnp.concatenate([wq_t_scaled, wg1_t], axis=1)   # (H, 2H)

    # Pack all per-feature vectors into one (8, 128) f32 tile.
    bias_pack = jnp.zeros((8, HIDDEN), jnp.float32)
    bias_pack = bias_pack.at[0].set(bq_scaled)
    bias_pack = bias_pack.at[1].set(bo)
    bias_pack = bias_pack.at[2].set(bg)
    bias_pack = bias_pack.at[3].set(gamma)
    bias_pack = bias_pack.at[4].set(beta)

    # Block-diagonal "same head" ones mask (built once on host, resident input).
    row = jnp.arange(HIDDEN)[:, None] // HEAD_DIM
    col = jnp.arange(HIDDEN)[None, :] // HEAD_DIM
    mseg = (row == col).astype(jnp.bfloat16)

    return {
        "whq_t": whq_t.astype(jnp.bfloat16),
        "wo_t": wo.T.astype(jnp.bfloat16),
        "wg2_t": wg2_t.astype(jnp.bfloat16),
        "bias_pack": bias_pack,
        "mseg": mseg,
    }


def reference_step(h, x, p):
    """Pure-JAX replica of the PyTorch forward (same bf16 weight values, f32 math).

    Uses the scale-folded q projection, which is mathematically identical to the
    PyTorch `scores / sqrt(head_dim)` formulation.
    """
    B = h.shape[0]
    wqs_t = p["whq_t"][:, :HIDDEN].astype(jnp.float32)
    wg1_t = p["whq_t"][:, HIDDEN:].astype(jnp.float32)
    wo_t = p["wo_t"].astype(jnp.float32)
    wg2_t = p["wg2_t"].astype(jnp.float32)
    bqs = p["bias_pack"][0]
    bo = p["bias_pack"][1]
    bg = p["bias_pack"][2]
    gamma = p["bias_pack"][3]
    beta = p["bias_pack"][4]

    q = h @ wqs_t + bqs                                     # == q / sqrt(head_dim)
    ctx = jnp.stack([h, x, h + x, h * x], axis=1)           # (B, 4, H)
    qh = q.reshape(B, 1, NUM_HEADS, HEAD_DIM).transpose(0, 2, 1, 3)
    kh = ctx.reshape(B, 4, NUM_HEADS, HEAD_DIM).transpose(0, 2, 1, 3)
    scores = jnp.einsum("bhqd,bhkd->bhqk", qh, kh)          # scale already folded
    w = jax.nn.softmax(scores, axis=-1)
    ao = jnp.einsum("bhqk,bhkd->bhqd", w, kh)
    ao = ao.transpose(0, 2, 1, 3).reshape(B, HIDDEN)
    ao = ao @ wo_t + bo
    g = 0.5 * ao * (1.0 + jax.lax.erf(ao / math.sqrt(2.0)))
    gate = jax.nn.sigmoid(h @ wg1_t + g @ wg2_t + bg)
    y = g + h
    mean = y.mean(-1, keepdims=True)
    var = ((y - mean) ** 2).mean(-1, keepdims=True)
    cand = (y - mean) / jnp.sqrt(var + LN_EPS) * gamma + beta
    return gate * cand + (1.0 - gate) * h


if __name__ == "__main__":
    B = 64   # matches the PyTorch script's batch_size
    T = 4    # drive the cell over a few timesteps inside one pallas_call
    key = jax.random.PRNGKey(0)
    k_h, k_x, k_p = jax.random.split(key, 3)
    h0 = jax.random.normal(k_h, (B, HIDDEN), jnp.float32)
    x_seq = jax.random.normal(k_x, (T, B, INPUT), jnp.float32)
    params = init_params(k_p)

    # Multi-step path (time loop hoisted into the kernel).
    out_seq = attn_rnn_sequence(h0, x_seq, params)
    out_seq = jax.block_until_ready(out_seq)

    # Pure-JAX reference: Python loop of single-step forwards.
    h = h0
    refs = []
    for t in range(T):
        h = reference_step(h, x_seq[t], params)
        refs.append(h)
    ref_seq = jnp.stack(refs, axis=0)

    # bf16 MXU operands (f32 accumulation) -> loosened tolerance vs f32 reference.
    assert jnp.allclose(out_seq, ref_seq, rtol=5e-2, atol=5e-2), (
        "sequence mismatch vs JAX reference, max abs diff = "
        f"{float(jnp.max(jnp.abs(out_seq - ref_seq)))}")

    # Single-step path (exactly the PyTorch module forward semantics).
    out1 = attn_rnn_cell(h0, x_seq[0], params)
    out1 = jax.block_until_ready(out1)
    assert jnp.allclose(out1, ref_seq[0], rtol=5e-2, atol=5e-2), (
        "single-step mismatch vs JAX reference, max abs diff = "
        f"{float(jnp.max(jnp.abs(out1 - ref_seq[0])))}")

    print("KERNEL_OK")
</pallas_src>

<mosaic_0001>
module attributes {stable_mosaic.version = 11 : i64} {
  func.func @attn_rnn_seq_kernel(%arg0: i32, %arg1: i32, %arg2: memref<64x128xf32, #tpu.memory_space<vmem>>, %arg3: memref<1x64x128xf32, #tpu.memory_space<vmem>>, %arg4: memref<128x128xbf16, #tpu.memory_space<vmem>>, %arg5: memref<128x256xbf16, #tpu.memory_space<vmem>>, %arg6: memref<128x128xbf16, #tpu.memory_space<vmem>>, %arg7: memref<128x128xbf16, #tpu.memory_space<vmem>>, %arg8: memref<8x128xf32, #tpu.memory_space<vmem>>, %arg9: memref<1x64x128xf32, #tpu.memory_space<vmem>>, %arg10: memref<64x128xf32, #tpu.memory_space<vmem>>) attributes {dimension_semantics = [#tpu.dimension_semantics<parallel>, #tpu.dimension_semantics<arbitrary>], iteration_bounds = array<i64: 1, 4>, scalar_prefetch = 0 : i64, scratch_operands = 1 : i64, tpu.core_type = #tpu.core_type<tc>, window_params = [{transform_indices = @transform_0, window_bounds = array<i64: 64, 128>}, {transform_indices = @transform_1, window_bounds = array<i64: 1, 64, 128>}, {pipeline_mode = #tpu.pipeline_mode<synchronous>, transform_indices = @transform_2, window_bounds = array<i64: 128, 128>}, {pipeline_mode = #tpu.pipeline_mode<synchronous>, transform_indices = @transform_3, window_bounds = array<i64: 128, 256>}, {pipeline_mode = #tpu.pipeline_mode<synchronous>, transform_indices = @transform_4, window_bounds = array<i64: 128, 128>}, {pipeline_mode = #tpu.pipeline_mode<synchronous>, transform_indices = @transform_5, window_bounds = array<i64: 128, 128>}, {pipeline_mode = #tpu.pipeline_mode<synchronous>, transform_indices = @transform_6, window_bounds = array<i64: 8, 128>}, {transform_indices = @transform_7, window_bounds = array<i64: 1, 64, 128>}]} {
    %c0_i32 = arith.constant 0 : i32
    %0 = arith.cmpi eq, %arg1, %c0_i32 : i32
    %1 = arith.extui %0 : i1 to i32
    %c0_i32_0 = arith.constant 0 : i32
    %2 = arith.cmpi ne, %1, %c0_i32_0 : i32
    scf.if %2 {
      %c0_39 = arith.constant 0 : index
      %c0_40 = arith.constant 0 : index
      %106 = vector.load %arg2[%c0_39, %c0_40] : memref<64x128xf32, #tpu.memory_space<vmem>>, vector<64x128xf32>
      %c0_41 = arith.constant 0 : index
      %c0_42 = arith.constant 0 : index
      %107 = vector.load %arg10[%c0_41, %c0_42] : memref<64x128xf32, #tpu.memory_space<vmem>>, vector<64x128xf32>
      tpu.vector_store %arg10[%c0_41, %c0_42], %106 {strides = array<i32>} : memref<64x128xf32, #tpu.memory_space<vmem>>, vector<64x128xf32>,
    } else {
    }
    %c0 = arith.constant 0 : index
    %c0_1 = arith.constant 0 : index
    %3 = vector.load %arg10[%c0, %c0_1] : memref<64x128xf32, #tpu.memory_space<vmem>>, vector<64x128xf32>
    %c0_2 = arith.constant 0 : index
    %c0_3 = arith.constant 0 : index
    %c0_4 = arith.constant 0 : index
    %4 = vector.load %arg3[%c0_2, %c0_3, %c0_4] : memref<1x64x128xf32, #tpu.memory_space<vmem>>, vector<1x64x128xf32>
    %5 = vector.shape_cast %4 : vector<1x64x128xf32> to vector<64x128xf32>
    %c0_5 = arith.constant 0 : index
    %c0_6 = arith.constant 0 : index
    %6 = vector.load %arg8[%c0_5, %c0_6] : memref<8x128xf32, #tpu.memory_space<vmem>>, vector<1x128xf32>
    %c1 = arith.constant 1 : index
    %c0_7 = arith.constant 0 : index
    %7 = vector.load %arg8[%c1, %c0_7] : memref<8x128xf32, #tpu.memory_space<vmem>>, vector<1x128xf32>
    %c2 = arith.constant 2 : index
    %c0_8 = arith.constant 0 : index
    %8 = vector.load %arg8[%c2, %c0_8] : memref<8x128xf32, #tpu.memory_space<vmem>>, vector<1x128xf32>
    %c3 = arith.constant 3 : index
    %c0_9 = arith.constant 0 : index
    %9 = vector.load %arg8[%c3, %c0_9] : memref<8x128xf32, #tpu.memory_space<vmem>>, vector<1x128xf32>
    %c4 = arith.constant 4 : index
    %c0_10 = arith.constant 0 : index
    %10 = vector.load %arg8[%c4, %c0_10] : memref<8x128xf32, #tpu.memory_space<vmem>>, vector<1x128xf32>
    %11 = arith.truncf %3 : vector<64x128xf32> to vector<64x128xbf16>
    %c0_11 = arith.constant 0 : index
    %c0_12 = arith.constant 0 : index
    %12 = vector.load %arg4[%c0_11, %c0_12] : memref<128x128xbf16, #tpu.memory_space<vmem>>, vector<128x128xbf16>
    %c0_13 = arith.constant 0 : index
    %c0_14 = arith.constant 0 : index
    %13 = vector.load %arg5[%c0_13, %c0_14] : memref<128x256xbf16, #tpu.memory_space<vmem>>, vector<128x256xbf16>
    %cst = arith.constant dense<0.000000e+00> : vector<64x256xf32>
    %14 = tpu.matmul %11, %13, %cst {dimension_numbers = #tpu.dot_dimension_numbers<[1], [0], [0], [1], [0, 0, 1, 1], [], []>} : vector<64x128xbf16>, vector<128x256xbf16>, vector<64x256xf32> -> vector<64x256xf32>
    %15 = vector.extract_strided_slice %14 {offsets = [0, 0], sizes = [64, 128], strides = [1, 1]} : vector<64x256xf32> to vector<64x128xf32>
    %16 = vector.broadcast %6 : vector<1x128xf32> to vector<64x128xf32>
    %17 = arith.addf %15, %16 : vector<64x128xf32>
    %18 = vector.extract_strided_slice %14 {offsets = [0, 128], sizes = [64, 128], strides = [1, 1]} : vector<64x256xf32> to vector<64x128xf32>
    %19 = arith.mulf %17, %3 : vector<64x128xf32>
    %20 = arith.mulf %17, %5 : vector<64x128xf32>
    %21 = arith.mulf %19, %5 : vector<64x128xf32>
    %22 = arith.truncf %19 : vector<64x128xf32> to vector<64x128xbf16>
    %cst_15 = arith.constant dense<0.000000e+00> : vector<64x128xf32>
    %23 = tpu.matmul %22, %12, %cst_15 {dimension_numbers = #tpu.dot_dimension_numbers<[1], [0], [0], [1], [0, 0, 1, 1], [], []>} : vector<64x128xbf16>, vector<128x128xbf16>, vector<64x128xf32> -> vector<64x128xf32>
    %24 = arith.truncf %20 : vector<64x128xf32> to vector<64x128xbf16>
    %cst_16 = arith.constant dense<0.000000e+00> : vector<64x128xf32>
    %25 = tpu.matmul %24, %12, %cst_16 {dimension_numbers = #tpu.dot_dimension_numbers<[1], [0], [0], [1], [0, 0, 1, 1], [], []>} : vector<64x128xbf16>, vector<128x128xbf16>, vector<64x128xf32> -> vector<64x128xf32>
    %26 = arith.truncf %21 : vector<64x128xf32> to vector<64x128xbf16>
    %cst_17 = arith.constant dense<0.000000e+00> : vector<64x128xf32>
    %27 = tpu.matmul %26, %12, %cst_17 {dimension_numbers = #tpu.dot_dimension_numbers<[1], [0], [0], [1], [0, 0, 1, 1], [], []>} : vector<64x128xbf16>, vector<128x128xbf16>, vector<64x128xf32> -> vector<64x128xf32>
    %28 = arith.addf %23, %25 : vector<64x128xf32>
    %29 = arith.maximumf %23, %25 : vector<64x128xf32>
    %30 = arith.maximumf %28, %27 : vector<64x128xf32>
    %31 = arith.maximumf %29, %30 : vector<64x128xf32>
    %32 = arith.subf %23, %31 : vector<64x128xf32>
    %33 = math.exp %32 : vector<64x128xf32>
    %34 = arith.subf %25, %31 : vector<64x128xf32>
    %35 = math.exp %34 : vector<64x128xf32>
    %36 = arith.subf %28, %31 : vector<64x128xf32>
    %37 = math.exp %36 : vector<64x128xf32>
    %38 = arith.subf %27, %31 : vector<64x128xf32>
    %39 = math.exp %38 : vector<64x128xf32>
    %40 = arith.addf %33, %35 : vector<64x128xf32>
    %41 = arith.addf %40, %37 : vector<64x128xf32>
    %42 = arith.addf %41, %39 : vector<64x128xf32>
    %43 = tpu.reciprocal %42 {approx = true} : vector<64x128xf32> -> vector<64x128xf32>
    %44 = arith.addf %33, %37 : vector<64x128xf32>
    %45 = arith.mulf %39, %5 : vector<64x128xf32>
    %46 = arith.addf %44, %45 : vector<64x128xf32>
    %47 = arith.mulf %3, %46 : vector<64x128xf32>
    %48 = arith.addf %35, %37 : vector<64x128xf32>
    %49 = arith.mulf %5, %48 : vector<64x128xf32>
    %50 = arith.addf %47, %49 : vector<64x128xf32>
    %51 = arith.mulf %50, %43 : vector<64x128xf32>
    %52 = arith.truncf %51 : vector<64x128xf32> to vector<64x128xbf16>
    %c0_18 = arith.constant 0 : index
    %c0_19 = arith.constant 0 : index
    %53 = vector.load %arg6[%c0_18, %c0_19] : memref<128x128xbf16, #tpu.memory_space<vmem>>, vector<128x128xbf16>
    %cst_20 = arith.constant dense<0.000000e+00> : vector<64x128xf32>
    %54 = tpu.matmul %52, %53, %cst_20 {dimension_numbers = #tpu.dot_dimension_numbers<[1], [0], [0], [1], [0, 0, 1, 1], [], []>} : vector<64x128xbf16>, vector<128x128xbf16>, vector<64x128xf32> -> vector<64x128xf32>
    %55 = vector.broadcast %7 : vector<1x128xf32> to vector<64x128xf32>
    %56 = arith.addf %54, %55 : vector<64x128xf32>
    %cst_21 = arith.constant 5.000000e-01 : f32
    %57 = vector.broadcast %cst_21 : f32 to vector<64x128xf32>
    %58 = arith.mulf %57, %56 : vector<64x128xf32>
    %cst_22 = arith.constant 0.707106769 : f32
    %59 = vector.broadcast %cst_22 : f32 to vector<64x128xf32>
    %60 = arith.mulf %56, %59 : vector<64x128xf32>
    %61 = math.erf %60 : vector<64x128xf32>
    %cst_23 = arith.constant 1.000000e+00 : f32
    %62 = vector.broadcast %cst_23 : f32 to vector<64x128xf32>
    %63 = arith.addf %62, %61 : vector<64x128xf32>
    %64 = arith.mulf %58, %63 : vector<64x128xf32>
    %65 = arith.truncf %64 : vector<64x128xf32> to vector<64x128xbf16>
    %c0_24 = arith.constant 0 : index
    %c0_25 = arith.constant 0 : index
    %66 = vector.load %arg7[%c0_24, %c0_25] : memref<128x128xbf16, #tpu.memory_space<vmem>>, vector<128x128xbf16>
    %cst_26 = arith.constant dense<0.000000e+00> : vector<64x128xf32>
    %67 = tpu.matmul %65, %66, %cst_26 {dimension_numbers = #tpu.dot_dimension_numbers<[1], [0], [0], [1], [0, 0, 1, 1], [], []>} : vector<64x128xbf16>, vector<128x128xbf16>, vector<64x128xf32> -> vector<64x128xf32>
    %68 = arith.addf %18, %67 : vector<64x128xf32>
    %69 = vector.broadcast %8 : vector<1x128xf32> to vector<64x128xf32>
    %70 = arith.addf %68, %69 : vector<64x128xf32>
    %71 = arith.negf %70 : vector<64x128xf32>
    %72 = math.exp %71 : vector<64x128xf32>
    %cst_27 = arith.constant 1.000000e+00 : f32
    %73 = vector.broadcast %cst_27 : f32 to vector<64x128xf32>
    %74 = arith.addf %73, %72 : vector<64x128xf32>
    %75 = arith.divf %73, %74 : vector<64x128xf32>
    %76 = arith.addf %64, %3 : vector<64x128xf32>
    %cst_28 = arith.constant dense<0.000000e+00> : vector<64xf32>
    %77 = vector.multi_reduction <add>, %76, %cst_28 [1] : vector<64x128xf32> to vector<64xf32>
    %78 = vector.shape_cast %77 : vector<64xf32> to vector<64x1xf32>
    %cst_29 = arith.constant 1.280000e+02 : f32
    %79 = vector.broadcast %cst_29 : f32 to vector<64x1xf32>
    %80 = arith.divf %78, %79 : vector<64x1xf32>
    %81 = vector.broadcast %80 : vector<64x1xf32> to vector<64x128xf32>
    %82 = arith.subf %76, %81 : vector<64x128xf32>
    %83 = arith.mulf %82, %82 : vector<64x128xf32>
    %cst_30 = arith.constant dense<0.000000e+00> : vector<64xf32>
    %84 = vector.multi_reduction <add>, %83, %cst_30 [1] : vector<64x128xf32> to vector<64xf32>
    %85 = vector.shape_cast %84 : vector<64xf32> to vector<64x1xf32>
    %cst_31 = arith.constant 1.280000e+02 : f32
    %86 = vector.broadcast %cst_31 : f32 to vector<64x1xf32>
    %87 = arith.divf %85, %86 : vector<64x1xf32>
    %cst_32 = arith.constant 9.99999974E-6 : f32
    %88 = vector.broadcast %cst_32 : f32 to vector<64x1xf32>
    %89 = arith.addf %87, %88 : vector<64x1xf32>
    %90 = math.rsqrt %89 : vector<64x1xf32>
    %91 = vector.broadcast %90 : vector<64x1xf32> to vector<64x128xf32>
    %92 = arith.mulf %82, %91 : vector<64x128xf32>
    %93 = vector.broadcast %9 : vector<1x128xf32> to vector<64x128xf32>
    %94 = arith.mulf %92, %93 : vector<64x128xf32>
    %95 = vector.broadcast %10 : vector<1x128xf32> to vector<64x128xf32>
    %96 = arith.addf %94, %95 : vector<64x128xf32>
    %97 = arith.mulf %75, %96 : vector<64x128xf32>
    %cst_33 = arith.constant 1.000000e+00 : f32
    %98 = vector.broadcast %cst_33 : f32 to vector<64x128xf32>
    %99 = arith.subf %98, %75 : vector<64x128xf32>
    %100 = arith.mulf %99, %3 : vector<64x128xf32>
    %101 = arith.addf %97, %100 : vector<64x128xf32>
    %c0_34 = arith.constant 0 : index
    %c0_35 = arith.constant 0 : index
    %102 = vector.load %arg10[%c0_34, %c0_35] : memref<64x128xf32, #tpu.memory_space<vmem>>, vector<64x128xf32>
    tpu.vector_store %arg10[%c0_34, %c0_35], %101 {strides = array<i32>} : memref<64x128xf32, #tpu.memory_space<vmem>>, vector<64x128xf32>,
    %c0_36 = arith.constant 0 : index
    %c0_37 = arith.constant 0 : index
    %c0_38 = arith.constant 0 : index
    %103 = vector.load %arg9[%c0_36, %c0_37, %c0_38] : memref<1x64x128xf32, #tpu.memory_space<vmem>>, vector<1x64x128xf32>
    %104 = vector.shape_cast %103 : vector<1x64x128xf32> to vector<64x128xf32>
    %105 = vector.shape_cast %101 : vector<64x128xf32> to vector<1x64x128xf32>
    tpu.vector_store %arg9[%c0_36, %c0_37, %c0_38], %105 {strides = array<i32>} : memref<1x64x128xf32, #tpu.memory_space<vmem>>, vector<1x64x128xf32>,
    return
  }
  func.func @transform_0(%arg0: i32, %arg1: i32) -> (i32, i32) {
    %c0_i32 = arith.constant 0 : i32
    %c0_i32_0 = arith.constant 0 : i32
    return %arg0, %c0_i32 : i32, i32
  }
  func.func @transform_1(%arg0: i32, %arg1: i32) -> (i32, i32, i32) {
    %c0_i32 = arith.constant 0 : i32
    %c0_i32_0 = arith.constant 0 : i32
    return %arg1, %arg0, %c0_i32 : i32, i32, i32
  }
  func.func @transform_2(%arg0: i32, %arg1: i32) -> (i32, i32) {
    %c0_i32 = arith.constant 0 : i32
    %c0_i32_0 = arith.constant 0 : i32
    %c0_i32_1 = arith.constant 0 : i32
    return %c0_i32, %c0_i32_0 : i32, i32
  }
  func.func @transform_3(%arg0: i32, %arg1: i32) -> (i32, i32) {
    %c0_i32 = arith.constant 0 : i32
    %c0_i32_0 = arith.constant 0 : i32
    %c0_i32_1 = arith.constant 0 : i32
    return %c0_i32, %c0_i32_0 : i32, i32
  }
  func.func @transform_4(%arg0: i32, %arg1: i32) -> (i32, i32) {
    %c0_i32 = arith.constant 0 : i32
    %c0_i32_0 = arith.constant 0 : i32
    %c0_i32_1 = arith.constant 0 : i32
    return %c0_i32, %c0_i32_0 : i32, i32
  }
  func.func @transform_5(%arg0: i32, %arg1: i32) -> (i32, i32) {
    %c0_i32 = arith.constant 0 : i32
    %c0_i32_0 = arith.constant 0 : i32
    %c0_i32_1 = arith.constant 0 : i32
    return %c0_i32, %c0_i32_0 : i32, i32
  }
  func.func @transform_6(%arg0: i32, %arg1: i32) -> (i32, i32) {
    %c0_i32 = arith.constant 0 : i32
    %c0_i32_0 = arith.constant 0 : i32
    %c0_i32_1 = arith.constant 0 : i32
    return %c0_i32, %c0_i32_0 : i32, i32
  }
  func.func @transform_7(%arg0: i32, %arg1: i32) -> (i32, i32, i32) {
    %c0_i32 = arith.constant 0 : i32
    %c0_i32_0 = arith.constant 0 : i32
    return %arg1, %arg0, %c0_i32 : i32, i32, i32
  }
}

</mosaic_0001>

<llo_original>
// kernel: tpu_custom_call.1
$region0: #{tpu_custom_call.1}
  #allocation0 [shape = 'u32[]', space=smem, size = 0x4, offset = 0x4, fixed_abs, tag = 'smem constant byte address 0x4 - core index']
  #allocation1 [shape = 'u32[72,128]{1,0:T(1,128)}', space=vmem, size = 0x9000, scoped, tag = 'internal scratch']
  #allocation2 [shape = 'f32[64,128]{1,0:T(8,128)}', space=vmem, size = 0x8000, scoped, tag = 'scratch operand']
  %s0 = inlined_call_operand.hbm [shape: f32[64,128], index: 0, kind: input, shape index: {}]
  %s1 = inlined_call_operand.hbm [shape: f32[4,64,128], index: 1, kind: input, shape index: {}]
  %s2 = inlined_call_operand.hbm [shape: bf16[128,128], index: 2, kind: input, shape index: {}]
  %s3 = inlined_call_operand.hbm [shape: bf16[128,256], index: 3, kind: input, shape index: {}]
  %s4 = inlined_call_operand.hbm [shape: bf16[128,128], index: 4, kind: input, shape index: {}]
  %s5 = inlined_call_operand.hbm [shape: bf16[128,128], index: 5, kind: input, shape index: {}]
  %s6 = inlined_call_operand.hbm [shape: f32[8,128], index: 6, kind: input, shape index: {}]
  %s7 = inlined_call_operand.hbm [shape: f32[4,64,128], index: 7, kind: output, shape index: {}]
  %s8 = sld [smem:[#allocation0]]
  $region93: #{tpu_custom_call.1} parent=0
    _
  %s10 = ssub.s32 1, %s8
  %s11 = scalar_select 0, %s10, %s8
  $region1: #{tpu_custom_call.1} parent=0
    #allocation3 [shape = 'u8[32768]{0}', space=vmem, size = 0x8000, scoped, tag = 'input window, operand 0, single buffered']
    #allocation4 [shape = 's32[2]{0}', space=sflag, size = 0x8, scoped, tag = 'scoped memory for tpu_custom_call.1']
    #allocation5 [shape = 's32[2]{0}', space=sflag, size = 0x8, scoped, tag = 'scoped memory for tpu_custom_call.1']
    #allocation6 [shape = 'u8[65536]{0}', space=vmem, size = 0x10000, scoped, tag = 'input window, operand 1']
    #allocation7 [shape = 's32[2]{0}', space=sflag, size = 0x8, scoped, tag = 'scoped memory for tpu_custom_call.1']
    #allocation8 [shape = 'u8[32768]{0}', space=vmem, size = 0x8000, scoped, tag = 'input window, operand 2, single buffered']
    #allocation9 [shape = 'u8[65536]{0}', space=vmem, size = 0x10000, scoped, tag = 'input window, operand 3, single buffered']
    #allocation10 [shape = 's32[1]{0}', space=sflag, size = 0x4, scoped, tag = 'scoped memory for tpu_custom_call.1']
    #allocation11 [shape = 'u8[32768]{0}', space=vmem, size = 0x8000, scoped, tag = 'input window, operand 4, single buffered']
    #allocation12 [shape = 'u8[32768]{0}', space=vmem, size = 0x8000, scoped, tag = 'input window, operand 5, single buffered']
    #allocation13 [shape = 's32[1]{0}', space=sflag, size = 0x4, scoped, tag = 'scoped memory for tpu_custom_call.1']
    #allocation14 [shape = 'u8[4096]{0}', space=vmem, size = 0x1000, scoped, tag = 'input window, operand 6, single buffered']
    #allocation15 [shape = 'u8[65536]{0}', space=vmem, size = 0x10000, scoped, tag = 'output window, operand 0']
    %12 = vsyncpa [#allocation4], 0
    %13 = vsyncpa [#allocation7], 0
    %s14 = scalar_lea.sflag [#allocation7], 1
    %15 = vsyncpa %s14, 0
    %16 = vsyncpa [#allocation10], 0
    %17 = vsyncpa [#allocation13], 0
    %18 = vsyncpa [#allocation5], 0
    %s19 = scalar_lea.sflag [#allocation5], 1
    %20 = vsyncpa %s19, 0
    loop: start=0, step=1, limit=6
    $region2: #{tpu_custom_call.1} parent=1 // loop_pre_header
      _
    $region3: #{tpu_custom_call.1} parent=1 // loop_header
      %s22 = sphi 0, %s26
      %p23 = scmp.ge.s32.totalorder %s22, 6
      %s29 = sphi 0, %s41
      %s30 = sphi 0, %s37
      %s31 = sphi 0, %s29
      %s32 = sphi 0, %s30
      %s33 = sphi 0, %s31
      %s34 = sphi 0, %s32
      %s44 = sphi 0, %s46
      %s47 = sphi 0, %s44
      %s48 = sphi 0, %s47
      %s64 = sphi 0, %s48
      %s72 = sphi 0, %s74
      %s75 = sphi 0, %s72
      %s76 = sphi 0, %s75
      %s92 = sphi 0, %s76
      %s96 = sphi 0, %s96
      %s98 = sphi 0, %s96
      %s99 = sphi 0, %s98
      %s113 = sphi 0, %s99
      %s117 = sphi 0, %s117
      %s119 = sphi 0, %s117
      %s120 = sphi 0, %s119
      %s134 = sphi 0, %s120
      %s138 = sphi 0, %s138
      %s140 = sphi 0, %s138
      %s141 = sphi 0, %s140
      %s155 = sphi 0, %s141
      %s159 = sphi 0, %s159
      %s161 = sphi 0, %s159
      %s162 = sphi 0, %s161
      %s176 = sphi 0, %s162
      %s180 = sphi 0, %s180
      %s182 = sphi 0, %s180
      %s183 = sphi 0, %s182
      %s197 = sphi 0, %s183
      %s205 = sphi 0, %s207
      %s208 = sphi 0, %s205
      %s209 = sphi 0, %s208
      %s225 = sphi 0, %s209
    $region4: #{tpu_custom_call.1} parent=1 // loop_header_branch
      %25 = sbr.rel (%p23) target = $region8
    $region5: #{tpu_custom_call.1} parent=1 // loop_body
      %s27 = ssub.s32 %s22, 1
      %s28 = ssub.s32 %s22, 2
      %s35 = sadd.s32 1, %s30
      %p36 = scmp.ge.s32.totalorder %s35, 4
      %s37 = scalar_select %p36, 0, %s35
      %s38 = sadd.s32 1, %s29
      %s39 = scalar_select %p36, %s38, %s29
      %p40 = scmp.ge.s32.totalorder %s39, 1
      %s41 = scalar_select %p40, 0, %s39
      %s42 = ssub.s32 %s29, %s41
      %p43 = scmp.eq.s32.totalorder %s42, 0
      %s45 = sadd.s32 %s44, 1
      %s46 = scalar_select %p43, %s44, %s45
      %p49 = pneg %p43
      %p50 = scmp.eq.s32.totalorder %s22, 3
      %p51 = por %p49, %p50
      %p52 = scmp.ne.s32.totalorder %s44, %s47
      %p53 = scmp.eq.s32.totalorder %s22, 0
      %p54 = por %p52, %p53
      %p55 = scmp.ne.s32.totalorder %s44, %s47
      %p56 = scmp.eq.s32.totalorder %s27, 3
      %p57 = por %p55, %p56
      %p58 = scmp.ne.s32.totalorder %s47, %s48
      %p59 = scmp.eq.s32.totalorder %s27, 0
      %p60 = por %p58, %p59
      %p61 = scmp.ne.s32.totalorder %s47, %s48
      %p62 = scmp.eq.s32.totalorder %s28, 3
      %p63 = por %p61, %p62
      %p65 = scmp.ne.s32.totalorder %s48, %s64
      %p66 = scmp.eq.s32.totalorder %s28, 0
      %p67 = por %p65, %p66
      %s68 = ssub.s32 %s30, %s37
      %s69 = ssub.s32 %s29, %s41
      %s70 = sor.u32 %s68, %s69
      %p71 = scmp.eq.s32.totalorder %s70, 0
      %s73 = sadd.s32 %s72, 1
      %s74 = scalar_select %p71, %s72, %s73
      %p77 = pneg %p71
      %p78 = scmp.eq.s32.totalorder %s22, 3
      %p79 = por %p77, %p78
      %p80 = scmp.ne.s32.totalorder %s72, %s75
      %p81 = scmp.eq.s32.totalorder %s22, 0
      %p82 = por %p80, %p81
      %p83 = scmp.ne.s32.totalorder %s72, %s75
      %p84 = scmp.eq.s32.totalorder %s27, 3
      %p85 = por %p83, %p84
      %p86 = scmp.ne.s32.totalorder %s75, %s76
      %p87 = scmp.eq.s32.totalorder %s27, 0
      %p88 = por %p86, %p87
      %p89 = scmp.ne.s32.totalorder %s75, %s76
      %p90 = scmp.eq.s32.totalorder %s28, 3
      %p91 = por %p89, %p90
      %p93 = scmp.ne.s32.totalorder %s76, %s92
      %p94 = scmp.eq.s32.totalorder %s28, 0
      %p95 = por %p93, %p94
      %s97 = sadd.s32 %s96, 1
      %p100 = scmp.eq.s32.totalorder %s22, 3
      %p101 = scmp.ne.s32.totalorder %s96, %s98
      %p102 = scmp.eq.s32.totalorder %s22, 0
      %p103 = por %p101, %p102
      %p104 = scmp.ne.s32.totalorder %s96, %s98
      %p105 = scmp.eq.s32.totalorder %s27, 3
      %p106 = por %p104, %p105
      %p107 = scmp.ne.s32.totalorder %s98, %s99
      %p108 = scmp.eq.s32.totalorder %s27, 0
      %p109 = por %p107, %p108
      %p110 = scmp.ne.s32.totalorder %s98, %s99
      %p111 = scmp.eq.s32.totalorder %s28, 3
      %p112 = por %p110, %p111
      %p114 = scmp.ne.s32.totalorder %s99, %s113
      %p115 = scmp.eq.s32.totalorder %s28, 0
      %p116 = por %p114, %p115
      %s118 = sadd.s32 %s117, 1
      %p121 = scmp.eq.s32.totalorder %s22, 3
      %p122 = scmp.ne.s32.totalorder %s117, %s119
      %p123 = scmp.eq.s32.totalorder %s22, 0
      %p124 = por %p122, %p123
      %p125 = scmp.ne.s32.totalorder %s117, %s119
      %p126 = scmp.eq.s32.totalorder %s27, 3
      %p127 = por %p125, %p126
      %p128 = scmp.ne.s32.totalorder %s119, %s120
      %p129 = scmp.eq.s32.totalorder %s27, 0
      %p130 = por %p128, %p129
      %p131 = scmp.ne.s32.totalorder %s119, %s120
      %p132 = scmp.eq.s32.totalorder %s28, 3
      %p133 = por %p131, %p132
      %p135 = scmp.ne.s32.totalorder %s120, %s134
      %p136 = scmp.eq.s32.totalorder %s28, 0
      %p137 = por %p135, %p136
      %s139 = sadd.s32 %s138, 1
      %p142 = scmp.eq.s32.totalorder %s22, 3
      %p143 = scmp.ne.s32.totalorder %s138, %s140
      %p144 = scmp.eq.s32.totalorder %s22, 0
      %p145 = por %p143, %p144
      %p146 = scmp.ne.s32.totalorder %s138, %s140
      %p147 = scmp.eq.s32.totalorder %s27, 3
      %p148 = por %p146, %p147
      %p149 = scmp.ne.s32.totalorder %s140, %s141
      %p150 = scmp.eq.s32.totalorder %s27, 0
      %p151 = por %p149, %p150
      %p152 = scmp.ne.s32.totalorder %s140, %s141
      %p153 = scmp.eq.s32.totalorder %s28, 3
      %p154 = por %p152, %p153
      %p156 = scmp.ne.s32.totalorder %s141, %s155
      %p157 = scmp.eq.s32.totalorder %s28, 0
      %p158 = por %p156, %p157
      %s160 = sadd.s32 %s159, 1
      %p163 = scmp.eq.s32.totalorder %s22, 3
      %p164 = scmp.ne.s32.totalorder %s159, %s161
      %p165 = scmp.eq.s32.totalorder %s22, 0
      %p166 = por %p164, %p165
      %p167 = scmp.ne.s32.totalorder %s159, %s161
      %p168 = scmp.eq.s32.totalorder %s27, 3
      %p169 = por %p167, %p168
      %p170 = scmp.ne.s32.totalorder %s161, %s162
      %p171 = scmp.eq.s32.totalorder %s27, 0
      %p172 = por %p170, %p171
      %p173 = scmp.ne.s32.totalorder %s161, %s162
      %p174 = scmp.eq.s32.totalorder %s28, 3
      %p175 = por %p173, %p174
      %p177 = scmp.ne.s32.totalorder %s162, %s176
      %p178 = scmp.eq.s32.totalorder %s28, 0
      %p179 = por %p177, %p178
      %s181 = sadd.s32 %s180, 1
      %p184 = scmp.eq.s32.totalorder %s22, 3
      %p185 = scmp.ne.s32.totalorder %s180, %s182
      %p186 = scmp.eq.s32.totalorder %s22, 0
      %p187 = por %p185, %p186
      %p188 = scmp.ne.s32.totalorder %s180, %s182
      %p189 = scmp.eq.s32.totalorder %s27, 3
      %p190 = por %p188, %p189
      %p191 = scmp.ne.s32.totalorder %s182, %s183
      %p192 = scmp.eq.s32.totalorder %s27, 0
      %p193 = por %p191, %p192
      %p194 = scmp.ne.s32.totalorder %s182, %s183
      %p195 = scmp.eq.s32.totalorder %s28, 3
      %p196 = por %p194, %p195
      %p198 = scmp.ne.s32.totalorder %s183, %s197
      %p199 = scmp.eq.s32.totalorder %s28, 0
      %p200 = por %p198, %p199
      %s201 = ssub.s32 %s30, %s37
      %s202 = ssub.s32 %s29, %s41
      %s203 = sor.u32 %s201, %s202
      %p204 = scmp.eq.s32.totalorder %s203, 0
      %s206 = sadd.s32 %s205, 1
      %s207 = scalar_select %p204, %s205, %s206
      %p210 = pneg %p204
      %p211 = scmp.eq.s32.totalorder %s22, 3
      %p212 = por %p210, %p211
      %p213 = scmp.ne.s32.totalorder %s205, %s208
      %p214 = scmp.eq.s32.totalorder %s22, 0
      %p215 = por %p213, %p214
      %p216 = scmp.ne.s32.totalorder %s205, %s208
      %p217 = scmp.eq.s32.totalorder %s27, 3
      %p218 = por %p216, %p217
      %p219 = scmp.ne.s32.totalorder %s208, %s209
      %p220 = scmp.eq.s32.totalorder %s27, 0
      %p221 = por %p219, %p220
      %p222 = scmp.ne.s32.totalorder %s208, %s209
      %p223 = scmp.eq.s32.totalorder %s28, 3
      %p224 = por %p222, %p223
      %p226 = scmp.ne.s32.totalorder %s209, %s225
      %p227 = scmp.eq.s32.totalorder %s28, 0
      %p228 = por %p226, %p227
      %p229 = scmp.le.s32.totalorder 1, %s22
      %p230 = scmp.lt.s32.totalorder %s22, 5
      %p231 = pnand %p229, %p230
      %p232 = pneg %p231
      // Predicated region
      $region9: #{tpu_custom_call.1} parent=5 // pred_check
        _
      $region10: #{tpu_custom_call.1} parent=5 // pred_check_branch
        %234 = sbr.rel (%p231) target = $region12
      $region11: #{tpu_custom_call.1} parent=5 // pred_region
        %s235 = ssub.s32 %s22, 1
        // Predicated region
        $region13: #{tpu_custom_call.1} parent=11 // pred_check
          %p236 = pneg %p60
        $region14: #{tpu_custom_call.1} parent=11 // pred_check_branch
          %238 = sbr.rel (%p236) target = $region16
        $region15: #{tpu_custom_call.1} parent=11 // pred_region
          %s239 = smul.u32 8, %s31
          %241 = vsyncadd [#allocation4], 0
          %s242 = smul.addr %s239, 8
          %s243 = scalar_lea.hbm %s0, %s242
          %s244 = sshll.u32 %s243, 4
          %s245 = int_to_ptr.hbm [resolvable:$true] %s244
          %s246 = sshll.u32 [#allocation3], 4
          %s247 = int_to_ptr.vmem [resolvable:$true] %s246
          %252 = dma.hbm_to_vmem [thread:$0]  %s245, 1024, %s247, [#allocation4], 128, 128, 8
        $region16: #{tpu_custom_call.1} parent=11 // pred_fallthru
          _
        // Predicated region
        $region17: #{tpu_custom_call.1} parent=11 // pred_check
          %p253 = pneg %p109
        $region18: #{tpu_custom_call.1} parent=11 // pred_check_branch
          %255 = sbr.rel (%p253) target = $region20
        $region19: #{tpu_custom_call.1} parent=11 // pred_region
          %257 = vsyncadd [#allocation7], 0
          %s258 = sshll.u32 %s2, 4
          %s259 = int_to_ptr.hbm [resolvable:$true] %s258
          %s260 = sshll.u32 [#allocation8], 4
          %s261 = int_to_ptr.vmem [resolvable:$true] %s260
          %266 = dma.hbm_to_vmem [thread:$0]  %s259, 1024, %s261, [#allocation7], 64, 64, 4
        $region20: #{tpu_custom_call.1} parent=11 // pred_fallthru
          _
        // Predicated region
        $region21: #{tpu_custom_call.1} parent=11 // pred_check
          %p267 = pneg %p130
        $region22: #{tpu_custom_call.1} parent=11 // pred_check_branch
          %269 = sbr.rel (%p267) target = $region24
        $region23: #{tpu_custom_call.1} parent=11 // pred_region
          %271 = vsyncadd [#allocation10], 0
          %s272 = sshll.u32 %s3, 4
          %s273 = int_to_ptr.hbm [resolvable:$true] %s272
          %s274 = sshll.u32 [#allocation9], 4
          %s275 = int_to_ptr.vmem [resolvable:$true] %s274
          %280 = dma.hbm_to_vmem [thread:$0]  %s273, 2048, %s275, [#allocation10], 128, 128, 8
        $region24: #{tpu_custom_call.1} parent=11 // pred_fallthru
          _
        // Predicated region
        $region25: #{tpu_custom_call.1} parent=11 // pred_check
          %p281 = pneg %p151
        $region26: #{tpu_custom_call.1} parent=11 // pred_check_branch
          %283 = sbr.rel (%p281) target = $region28
        $region27: #{tpu_custom_call.1} parent=11 // pred_region
          %285 = vsyncadd [#allocation10], 0
          %s286 = sshll.u32 %s4, 4
          %s287 = int_to_ptr.hbm [resolvable:$true] %s286
          %s288 = sshll.u32 [#allocation11], 4
          %s289 = int_to_ptr.vmem [resolvable:$true] %s288
          %294 = dma.hbm_to_vmem [thread:$0]  %s287, 1024, %s289, [#allocation10], 64, 64, 4
        $region28: #{tpu_custom_call.1} parent=11 // pred_fallthru
          _
        // Predicated region
        $region29: #{tpu_custom_call.1} parent=11 // pred_check
          %p295 = pneg %p172
        $region30: #{tpu_custom_call.1} parent=11 // pred_check_branch
          %297 = sbr.rel (%p295) target = $region32
        $region31: #{tpu_custom_call.1} parent=11 // pred_region
          %299 = vsyncadd [#allocation13], 0
          %s300 = sshll.u32 %s5, 4
          %s301 = int_to_ptr.hbm [resolvable:$true] %s300
          %s302 = sshll.u32 [#allocation12], 4
          %s303 = int_to_ptr.vmem [resolvable:$true] %s302
          %308 = dma.hbm_to_vmem [thread:$0]  %s301, 1024, %s303, [#allocation13], 64, 64, 4
        $region32: #{tpu_custom_call.1} parent=11 // pred_fallthru
          _
        // Predicated region
        $region33: #{tpu_custom_call.1} parent=11 // pred_check
          %p309 = pneg %p193
        $region34: #{tpu_custom_call.1} parent=11 // pred_check_branch
          %311 = sbr.rel (%p309) target = $region36
        $region35: #{tpu_custom_call.1} parent=11 // pred_region
          %313 = vsyncadd [#allocation13], 0
          %s315 = sshll.u32 %s6, 4
          %s316 = int_to_ptr.hbm [resolvable:$true] %s315
          %s317 = sshll.u32 [#allocation14], 4
          %s318 = int_to_ptr.vmem [resolvable:$true] %s317
          %320 = dma.hbm_to_vmem [thread:$0]  %s316, 128, %s318, [#allocation13]
        $region36: #{tpu_custom_call.1} parent=11 // pred_fallthru
          _
      $region12: #{tpu_custom_call.1} parent=5 // pred_fallthru
        _
      %p321 = scmp.lt.s32.totalorder %s22, 4
      // Predicated region
      $region37: #{tpu_custom_call.1} parent=5 // pred_check
        %p322 = pneg %p321
      $region38: #{tpu_custom_call.1} parent=5 // pred_check_branch
        %324 = sbr.rel (%p322) target = $region40
      $region39: #{tpu_custom_call.1} parent=5 // pred_region
        // Predicated region
        $region41: #{tpu_custom_call.1} parent=39 // pred_check
          %p325 = pneg %p82
        $region42: #{tpu_custom_call.1} parent=39 // pred_check_branch
          %327 = sbr.rel (%p325) target = $region44
        $region43: #{tpu_custom_call.1} parent=39 // pred_region
          %s328 = sand.u32 %s22, 1
          %s329 = scalar_lea.sflag [#allocation7], %s328
          %s330 = sand.u32 %s72, 1
          %s331 = smul.addr %s330, 64
          %s332 = scalar_lea.vmem [#allocation6], %s331
          %s333 = smul.u32 8, %s29
          %335 = vsyncadd %s329, 0
          %s336 = smul.addr %s30, 8
          %s337 = sadd.s32 %s333, %s336
          %s338 = smul.addr %s337, 8
          %s339 = scalar_lea.hbm %s1, %s338
          %s340 = sshll.u32 %s339, 4
          %s341 = int_to_ptr.hbm [resolvable:$true] %s340
          %s342 = sshll.u32 %s332, 4
          %s343 = int_to_ptr.vmem [resolvable:$true] %s342
          %348 = dma.hbm_to_vmem [thread:$0]  %s341, 1024, %s343, %s329, 128, 128, 8
        $region44: #{tpu_custom_call.1} parent=39 // pred_fallthru
          _
      $region40: #{tpu_custom_call.1} parent=5 // pred_fallthru
        _
      %p349 = scmp.le.s32.totalorder 1, %s22
      %p350 = scmp.lt.s32.totalorder %s22, 5
      %p351 = pnand %p349, %p350
      %p352 = pneg %p351
      // Predicated region
      $region45: #{tpu_custom_call.1} parent=5 // pred_check
        _
      $region46: #{tpu_custom_call.1} parent=5 // pred_check_branch
        %354 = sbr.rel (%p351) target = $region48
      $region47: #{tpu_custom_call.1} parent=5 // pred_region
        %s355 = ssub.s32 %s22, 1
        // Predicated region
        $region49: #{tpu_custom_call.1} parent=47 // pred_check
          %p356 = pneg %p60
        $region50: #{tpu_custom_call.1} parent=47 // pred_check_branch
          %358 = sbr.rel (%p356) target = $region52
        $region51: #{tpu_custom_call.1} parent=47 // pred_region
          %360 = dma.done [#allocation4], 1024
        $region52: #{tpu_custom_call.1} parent=47 // pred_fallthru
          _
        %s361 = sand.u32 %s27, 1
        %s362 = scalar_lea.sflag [#allocation7], %s361
        %s363 = sand.u32 %s75, 1
        %s364 = smul.addr %s363, 64
        %s365 = scalar_lea.vmem [#allocation6], %s364
        // Predicated region
        $region53: #{tpu_custom_call.1} parent=47 // pred_check
          %p366 = pneg %p88
        $region54: #{tpu_custom_call.1} parent=47 // pred_check_branch
          %368 = sbr.rel (%p366) target = $region56
        $region55: #{tpu_custom_call.1} parent=47 // pred_region
          %370 = dma.done %s362, 1024
        $region56: #{tpu_custom_call.1} parent=47 // pred_fallthru
          _
        // Predicated region
        $region57: #{tpu_custom_call.1} parent=47 // pred_check
          %p371 = pneg %p109
        $region58: #{tpu_custom_call.1} parent=47 // pred_check_branch
          %373 = sbr.rel (%p371) target = $region60
        $region59: #{tpu_custom_call.1} parent=47 // pred_region
          %375 = dma.done [#allocation7], 1024
        $region60: #{tpu_custom_call.1} parent=47 // pred_fallthru
          _
        // Predicated region
        $region61: #{tpu_custom_call.1} parent=47 // pred_check
          %p376 = pneg %p130
        $region62: #{tpu_custom_call.1} parent=47 // pred_check_branch
          %378 = sbr.rel (%p376) target = $region64
        $region63: #{tpu_custom_call.1} parent=47 // pred_region
          %380 = dma.done [#allocation10], 2048
        $region64: #{tpu_custom_call.1} parent=47 // pred_fallthru
          _
        // Predicated region
        $region65: #{tpu_custom_call.1} parent=47 // pred_check
          %p381 = pneg %p151
        $region66: #{tpu_custom_call.1} parent=47 // pred_check_branch
          %383 = sbr.rel (%p381) target = $region68
        $region67: #{tpu_custom_call.1} parent=47 // pred_region
          %385 = dma.done [#allocation10], 1024
        $region68: #{tpu_custom_call.1} parent=47 // pred_fallthru
          _
        // Predicated region
        $region69: #{tpu_custom_call.1} parent=47 // pred_check
          %p386 = pneg %p172
        $region70: #{tpu_custom_call.1} parent=47 // pred_check_branch
          %388 = sbr.rel (%p386) target = $region72
        $region71: #{tpu_custom_call.1} parent=47 // pred_region
          %390 = dma.done [#allocation13], 1024
        $region72: #{tpu_custom_call.1} parent=47 // pred_fallthru
          _
        // Predicated region
        $region73: #{tpu_custom_call.1} parent=47 // pred_check
          %p391 = pneg %p193
        $region74: #{tpu_custom_call.1} parent=47 // pred_check_branch
          %393 = sbr.rel (%p391) target = $region76
        $region75: #{tpu_custom_call.1} parent=47 // pred_region
          %395 = dma.done [#allocation13], 128
        $region76: #{tpu_custom_call.1} parent=47 // pred_fallthru
          _
        %p396 = pneg %p60
        %p397 = pneg %p57
        %s398 = sand.u32 %s27, 1
        %s399 = scalar_lea.sflag [#allocation7], %s398
        %s400 = sand.u32 %s75, 1
        %s401 = smul.addr %s400, 64
        %s402 = scalar_lea.vmem [#allocation6], %s401
        %p403 = pneg %p88
        %p404 = pneg %p85
        %p405 = pneg %p109
        %p406 = pneg %p106
        %p407 = pneg %p130
        %p408 = pneg %p127
        %p409 = pneg %p151
        %p410 = pneg %p148
        %p411 = pneg %p172
        %p412 = pneg %p169
        %p413 = pneg %p193
        %p414 = pneg %p190
        %p415 = pneg %p221
        %p416 = pneg %p218
        %s417 = sand.u32 %s208, 1
        %s418 = scalar_lea.sflag [#allocation5], %s417
        %s419 = sand.u32 %s208, 1
        %s420 = smul.addr %s419, 64
        %s421 = scalar_lea.vmem [#allocation15], %s420
        %s422 = smul.u32 8, %s31
        %s423 = smul.u32 8, %s31
        %s424 = smul.u32 8, %s31
        %p425 = scmp.eq.s32.totalorder %s32, 0
        // Predicated region
        $region77: #{tpu_custom_call.1} parent=47 // pred_check
          %p426 = pneg %p425
        $region78: #{tpu_custom_call.1} parent=47 // pred_check_branch
          %428 = sbr.rel (%p426) target = $region80
        $region79: #{tpu_custom_call.1} parent=47 // pred_region
          %v429 = vld [vmem:[#allocation3] sm:$0xff]
          %v430 = vld [vmem:[#allocation3 + $0x8] sm:$0xff]
          %v431 = vld [vmem:[#allocation3 + $0x10] sm:$0xff]
          %v432 = vld [vmem:[#allocation3 + $0x18] sm:$0xff]
          %v433 = vld [vmem:[#allocation3 + $0x20] sm:$0xff]
          %v434 = vld [vmem:[#allocation3 + $0x28] sm:$0xff]
          %v435 = vld [vmem:[#allocation3 + $0x30] sm:$0xff]
          %v436 = vld [vmem:[#allocation3 + $0x38] sm:$0xff]
          %437 = vst [vmem:[#allocation2] sm:$0xff] %v429
          %438 = vst [vmem:[#allocation2 + $0x8] sm:$0xff] %v430
          %439 = vst [vmem:[#allocation2 + $0x10] sm:$0xff] %v431
          %440 = vst [vmem:[#allocation2 + $0x18] sm:$0xff] %v432
          %441 = vst [vmem:[#allocation2 + $0x20] sm:$0xff] %v433
          %442 = vst [vmem:[#allocation2 + $0x28] sm:$0xff] %v434
          %443 = vst [vmem:[#allocation2 + $0x30] sm:$0xff] %v435
          %444 = vst [vmem:[#allocation2 + $0x38] sm:$0xff] %v436
        $region80: #{tpu_custom_call.1} parent=47 // pred_fallthru
          _
        %v445 = vld [vmem:[#allocation2] sm:$0xff]
        %v446 = vld [vmem:[#allocation2 + $0x8] sm:$0xff]
        %v447 = vld [vmem:[#allocation2 + $0x10] sm:$0xff]
        %v448 = vld [vmem:[#allocation2 + $0x18] sm:$0xff]
        %v449 = vld [vmem:[#allocation2 + $0x20] sm:$0xff]
        %v450 = vld [vmem:[#allocation2 + $0x28] sm:$0xff]
        %v451 = vld [vmem:[#allocation2 + $0x30] sm:$0xff]
        %v452 = vld [vmem:[#allocation2 + $0x38] sm:$0xff]
        %v453 = vld [vmem:[%s365] sm:$0xff]
        %v454 = vld [vmem:[%s365 + $0x8] sm:$0xff]
        %v455 = vld [vmem:[%s365 + $0x10] sm:$0xff]
        %v456 = vld [vmem:[%s365 + $0x18] sm:$0xff]
        %v457 = vld [vmem:[%s365 + $0x20] sm:$0xff]
        %v458 = vld [vmem:[%s365 + $0x28] sm:$0xff]
        %v459 = vld [vmem:[%s365 + $0x30] sm:$0xff]
        %v460 = vld [vmem:[%s365 + $0x38] sm:$0xff]
        %v461 = vld [vmem:[#allocation14] sm:$0x1]
        %v462 = vld [vmem:[#allocation14 + $0x1] sm:$0x1]
        %v463 = vld [vmem:[#allocation14 + $0x2] sm:$0x1]
        %v464 = vld [vmem:[#allocation14 + $0x3] sm:$0x1]
        %v465 = vld [vmem:[#allocation14 + $0x4] sm:$0x1]
        %v466 = vpack.c.bf16 %v446, %v445
        %v467 = vpack.c.bf16 %v448, %v447
        %v468 = vpack.c.bf16 %v450, %v449
        %v469 = vpack.c.bf16 %v452, %v451
        %v470 = vld [vmem:[#allocation8] sm:$0xf]
        %v471 = vld [vmem:[#allocation8 + $0x4] sm:$0xf]
        %v472 = vld [vmem:[#allocation8 + $0x8] sm:$0xf]
        %v473 = vld [vmem:[#allocation8 + $0xc] sm:$0xf]
        %v474 = vld [vmem:[#allocation8 + $0x10] sm:$0xf]
        %v475 = vld [vmem:[#allocation8 + $0x14] sm:$0xf]
        %v476 = vld [vmem:[#allocation8 + $0x18] sm:$0xf]
        %v477 = vld [vmem:[#allocation8 + $0x1c] sm:$0xf]
        %v478 = vld [vmem:[#allocation8 + $0x20] sm:$0xf]
        %v479 = vld [vmem:[#allocation8 + $0x24] sm:$0xf]
        %v480 = vld [vmem:[#allocation8 + $0x28] sm:$0xf]
        %v481 = vld [vmem:[#allocation8 + $0x2c] sm:$0xf]
        %v482 = vld [vmem:[#allocation8 + $0x30] sm:$0xf]
        %v483 = vld [vmem:[#allocation8 + $0x34] sm:$0xf]
        %v484 = vld [vmem:[#allocation8 + $0x38] sm:$0xf]
        %v485 = vld [vmem:[#allocation8 + $0x3c] sm:$0xf]
        %v486 = vld [vmem:[#allocation9] sm:$0xff]
        %v487 = vld [vmem:[#allocation9 + $0x8] sm:$0xff]
        %v488 = vld [vmem:[#allocation9 + $0x10] sm:$0xff]
        %v489 = vld [vmem:[#allocation9 + $0x18] sm:$0xff]
        %v490 = vld [vmem:[#allocation9 + $0x20] sm:$0xff]
        %v491 = vld [vmem:[#allocation9 + $0x28] sm:$0xff]
        %v492 = vld [vmem:[#allocation9 + $0x30] sm:$0xff]
        %v493 = vld [vmem:[#allocation9 + $0x38] sm:$0xff]
        %v494 = vld [vmem:[#allocation9 + $0x40] sm:$0xff]
        %v495 = vld [vmem:[#allocation9 + $0x48] sm:$0xff]
        %v496 = vld [vmem:[#allocation9 + $0x50] sm:$0xff]
        %v497 = vld [vmem:[#allocation9 + $0x58] sm:$0xff]
        %v498 = vld [vmem:[#allocation9 + $0x60] sm:$0xff]
        %v499 = vld [vmem:[#allocation9 + $0x68] sm:$0xff]
        %v500 = vld [vmem:[#allocation9 + $0x70] sm:$0xff]
        %v501 = vld [vmem:[#allocation9 + $0x78] sm:$0xff]
        %v518 = vunpack.c.l.b16 %v486
        %v519 = vunpack.c.h.b16 %v486
        %v520 = vunpack.c.l.b16 %v487
        %v521 = vunpack.c.h.b16 %v487
        %v522 = vunpack.c.l.b16 %v488
        %v523 = vunpack.c.h.b16 %v488
        %v524 = vunpack.c.l.b16 %v489
        %v525 = vunpack.c.h.b16 %v489
        %v526 = vunpack.c.l.b16 %v490
        %v527 = vunpack.c.h.b16 %v490
        %v528 = vunpack.c.l.b16 %v491
        %v529 = vunpack.c.h.b16 %v491
        %v530 = vunpack.c.l.b16 %v492
        %v531 = vunpack.c.h.b16 %v492
        %v532 = vunpack.c.l.b16 %v493
        %v533 = vunpack.c.h.b16 %v493
        %v534 = vunpack.c.l.b16 %v494
        %v535 = vunpack.c.h.b16 %v494
        %v536 = vunpack.c.l.b16 %v495
        %v537 = vunpack.c.h.b16 %v495
        %v538 = vunpack.c.l.b16 %v496
        %v539 = vunpack.c.h.b16 %v496
        %v540 = vunpack.c.l.b16 %v497
        %v541 = vunpack.c.h.b16 %v497
        %v542 = vunpack.c.l.b16 %v498
        %v543 = vunpack.c.h.b16 %v498
        %v544 = vunpack.c.l.b16 %v499
        %v545 = vunpack.c.h.b16 %v499
        %v546 = vunpack.c.l.b16 %v500
        %v547 = vunpack.c.h.b16 %v500
        %v548 = vunpack.c.l.b16 %v501
        %v549 = vunpack.c.h.b16 %v501
        %v550 = vpack.c.b16 %v520, %v518
        %v551 = vpack.c.b16 %v521, %v519
        %v552 = vpack.c.b16 %v524, %v522
        %v553 = vpack.c.b16 %v525, %v523
        %v554 = vpack.c.b16 %v528, %v526
        %v555 = vpack.c.b16 %v529, %v527
        %v556 = vpack.c.b16 %v532, %v530
        %v557 = vpack.c.b16 %v533, %v531
        %v558 = vpack.c.b16 %v536, %v534
        %v559 = vpack.c.b16 %v537, %v535
        %v560 = vpack.c.b16 %v540, %v538
        %v561 = vpack.c.b16 %v541, %v539
        %v562 = vpack.c.b16 %v544, %v542
        %v563 = vpack.c.b16 %v545, %v543
        %v564 = vpack.c.b16 %v548, %v546
        %v565 = vpack.c.b16 %v549, %v547
        %582 = vmatpush.bf16.msra.mxu0 %v564
        %583 = vmatpush.bf16.msra.mxu0 %v562
        %584 = vmatpush.bf16.msra.mxu0 %v560
        %585 = vmatpush.bf16.msra.mxu0 %v558
        %586 = vmatpush.bf16.msra.mxu0 %v556
        %587 = vmatpush.bf16.msra.mxu0 %v554
        %588 = vmatpush.bf16.msra.mxu0 %v552
        %589 = vmatpush.bf16.msra.mxu0 %v550
        %590 = vmatmul.bf16.gmra.mxu0 %v466
        %v591 = vpop.f32.mrf.mxu0
        %v592 = vadd.f32 0.0, %v591
        %v593 = vpop.f32.mrf.mxu0
        %v594 = vadd.f32 0.0, %v593
        %595 = vmatmul.bf16.gmra.mxu0 %v467
        %v596 = vpop.f32.mrf.mxu0
        %v597 = vadd.f32 0.0, %v596
        %v598 = vpop.f32.mrf.mxu0
        %v599 = vadd.f32 0.0, %v598
        %600 = vmatmul.bf16.gmra.mxu0 %v468
        %v601 = vpop.f32.mrf.mxu0
        %v602 = vadd.f32 0.0, %v601
        %v603 = vpop.f32.mrf.mxu0
        %v604 = vadd.f32 0.0, %v603
        %605 = vmatmul.bf16.gmra.mxu0 %v469
        %v606 = vpop.f32.mrf.mxu0
        %v607 = vadd.f32 0.0, %v606
        %v608 = vpop.f32.mrf.mxu0
        %v609 = vadd.f32 0.0, %v608
        %610 = vdwg.mxu0
        %611 = vmatpush.bf16.msra.mxu0 %v565
        %612 = vmatpush.bf16.msra.mxu0 %v563
        %613 = vmatpush.bf16.msra.mxu0 %v561
        %614 = vmatpush.bf16.msra.mxu0 %v559
        %615 = vmatpush.bf16.msra.mxu0 %v557
        %616 = vmatpush.bf16.msra.mxu0 %v555
        %617 = vmatpush.bf16.msra.mxu0 %v553
        %618 = vmatpush.bf16.msra.mxu0 %v551
        %619 = vmatmul.bf16.gmra.mxu0 %v466
        %v620 = vpop.f32.mrf.mxu0
        %v621 = vadd.f32 0.0, %v620
        %v622 = vpop.f32.mrf.mxu0
        %v623 = vadd.f32 0.0, %v622
        %624 = vmatmul.bf16.gmra.mxu0 %v467
        %v625 = vpop.f32.mrf.mxu0
        %v626 = vadd.f32 0.0, %v625
        %v627 = vpop.f32.mrf.mxu0
        %v628 = vadd.f32 0.0, %v627
        %629 = vmatmul.bf16.gmra.mxu0 %v468
        %v630 = vpop.f32.mrf.mxu0
        %v631 = vadd.f32 0.0, %v630
        %v632 = vpop.f32.mrf.mxu0
        %v633 = vadd.f32 0.0, %v632
        %634 = vmatmul.bf16.gmra.mxu0 %v469
        %v635 = vpop.f32.mrf.mxu0
        %v636 = vadd.f32 0.0, %v635
        %v637 = vpop.f32.mrf.mxu0
        %v638 = vadd.f32 0.0, %v637
        %639 = vdwg.mxu0
        %v640 = vperm.slane %v461, 0
        %v641 = vadd.f32 %v592, %v640
        %v642 = vadd.f32 %v594, %v640
        %v643 = vadd.f32 %v597, %v640
        %v644 = vadd.f32 %v599, %v640
        %v645 = vadd.f32 %v602, %v640
        %v646 = vadd.f32 %v604, %v640
        %v647 = vadd.f32 %v607, %v640
        %v648 = vadd.f32 %v609, %v640
        %v649 = vmul.f32 %v641, %v445
        %v650 = vmul.f32 %v642, %v446
        %v651 = vmul.f32 %v643, %v447
        %v652 = vmul.f32 %v644, %v448
        %v653 = vmul.f32 %v645, %v449
        %v654 = vmul.f32 %v646, %v450
        %v655 = vmul.f32 %v647, %v451
        %v656 = vmul.f32 %v648, %v452
        %v657 = vmul.f32 %v641, %v453
        %v658 = vmul.f32 %v642, %v454
        %v659 = vmul.f32 %v643, %v455
        %v660 = vmul.f32 %v644, %v456
        %v661 = vmul.f32 %v645, %v457
        %v662 = vmul.f32 %v646, %v458
        %v663 = vmul.f32 %v647, %v459
        %v664 = vmul.f32 %v648, %v460
        %v665 = vmul.f32 %v649, %v453
        %v666 = vmul.f32 %v650, %v454
        %v667 = vmul.f32 %v651, %v455
        %v668 = vmul.f32 %v652, %v456
        %v669 = vmul.f32 %v653, %v457
        %v670 = vmul.f32 %v654, %v458
        %v671 = vmul.f32 %v655, %v459
        %v672 = vmul.f32 %v656, %v460
        %v673 = vpack.c.bf16 %v650, %v649
        %v674 = vpack.c.bf16 %v652, %v651
        %v675 = vpack.c.bf16 %v654, %v653
        %v676 = vpack.c.bf16 %v656, %v655
        %v693 = vunpack.c.l.b16 %v470
        %v694 = vunpack.c.l.b16 %v471
        %v695 = vunpack.c.l.b16 %v472
        %v696 = vunpack.c.l.b16 %v473
        %v697 = vunpack.c.l.b16 %v474
        %v698 = vunpack.c.l.b16 %v475
        %v699 = vunpack.c.l.b16 %v476
        %v700 = vunpack.c.l.b16 %v477
        %v701 = vunpack.c.l.b16 %v478
        %v702 = vunpack.c.l.b16 %v479
        %v703 = vunpack.c.l.b16 %v480
        %v704 = vunpack.c.l.b16 %v481
        %v705 = vunpack.c.l.b16 %v482
        %v706 = vunpack.c.l.b16 %v483
        %v707 = vunpack.c.l.b16 %v484
        %v708 = vunpack.c.l.b16 %v485
        %v709 = vpack.c.b16 %v694, %v693
        %v710 = vpack.c.b16 %v696, %v695
        %v711 = vpack.c.b16 %v698, %v697
        %v712 = vpack.c.b16 %v700, %v699
        %v713 = vpack.c.b16 %v702, %v701
        %v714 = vpack.c.b16 %v704, %v703
        %v715 = vpack.c.b16 %v706, %v705
        %v716 = vpack.c.b16 %v708, %v707
        %725 = vmatpush.bf16.msra.mxu0 %v716
        %726 = vmatpush.bf16.msra.mxu0 %v715
        %727 = vmatpush.bf16.msra.mxu0 %v714
        %728 = vmatpush.bf16.msra.mxu0 %v713
        %729 = vmatpush.bf16.msra.mxu0 %v712
        %730 = vmatpush.bf16.msra.mxu0 %v711
        %731 = vmatpush.bf16.msra.mxu0 %v710
        %732 = vmatpush.bf16.msra.mxu0 %v709
        %733 = vmatmul.bf16.gmra.mxu0 %v673
        %v734 = vpop.f32.mrf.mxu0
        %v735 = vadd.f32 0.0, %v734
        %v736 = vpop.f32.mrf.mxu0
        %v737 = vadd.f32 0.0, %v736
        %738 = vmatmul.bf16.gmra.mxu0 %v674
        %v739 = vpop.f32.mrf.mxu0
        %v740 = vadd.f32 0.0, %v739
        %v741 = vpop.f32.mrf.mxu0
        %v742 = vadd.f32 0.0, %v741
        %743 = vmatmul.bf16.gmra.mxu0 %v675
        %v744 = vpop.f32.mrf.mxu0
        %v745 = vadd.f32 0.0, %v744
        %v746 = vpop.f32.mrf.mxu0
        %v747 = vadd.f32 0.0, %v746
        %748 = vmatmul.bf16.gmra.mxu0 %v676
        %v749 = vpop.f32.mrf.mxu0
        %v750 = vadd.f32 0.0, %v749
        %v751 = vpop.f32.mrf.mxu0
        %v752 = vadd.f32 0.0, %v751
        %753 = vdwg.mxu0
        %v754 = vpack.c.bf16 %v658, %v657
        %v755 = vpack.c.bf16 %v660, %v659
        %v756 = vpack.c.bf16 %v662, %v661
        %v757 = vpack.c.bf16 %v664, %v663
        %758 = vmatpush.bf16.msra.mxu0 %v716
        %759 = vmatpush.bf16.msra.mxu0 %v715
        %760 = vmatpush.bf16.msra.mxu0 %v714
        %761 = vmatpush.bf16.msra.mxu0 %v713
        %762 = vmatpush.bf16.msra.mxu0 %v712
        %763 = vmatpush.bf16.msra.mxu0 %v711
        %764 = vmatpush.bf16.msra.mxu0 %v710
        %765 = vmatpush.bf16.msra.mxu0 %v709
        %766 = vmatmul.bf16.gmra.mxu0 %v754
        %v767 = vpop.f32.mrf.mxu0
        %v768 = vadd.f32 0.0, %v767
        %v769 = vpop.f32.mrf.mxu0
        %v770 = vadd.f32 0.0, %v769
        %771 = vmatmul.bf16.gmra.mxu0 %v755
        %v772 = vpop.f32.mrf.mxu0
        %v773 = vadd.f32 0.0, %v772
        %v774 = vpop.f32.mrf.mxu0
        %v775 = vadd.f32 0.0, %v774
        %776 = vmatmul.bf16.gmra.mxu0 %v756
        %v777 = vpop.f32.mrf.mxu0
        %v778 = vadd.f32 0.0, %v777
        %v779 = vpop.f32.mrf.mxu0
        %v780 = vadd.f32 0.0, %v779
        %781 = vmatmul.bf16.gmra.mxu0 %v757
        %v782 = vpop.f32.mrf.mxu0
        %v783 = vadd.f32 0.0, %v782
        %v784 = vpop.f32.mrf.mxu0
        %v785 = vadd.f32 0.0, %v784
        %786 = vdwg.mxu0
        %v787 = vpack.c.bf16 %v666, %v665
        %v788 = vpack.c.bf16 %v668, %v667
        %v789 = vpack.c.bf16 %v670, %v669
        %v790 = vpack.c.bf16 %v672, %v671
        %791 = vmatpush.bf16.msra.mxu0 %v716
        %792 = vmatpush.bf16.msra.mxu0 %v715
        %793 = vmatpush.bf16.msra.mxu0 %v714
        %794 = vmatpush.bf16.msra.mxu0 %v713
        %795 = vmatpush.bf16.msra.mxu0 %v712
        %796 = vmatpush.bf16.msra.mxu0 %v711
        %797 = vmatpush.bf16.msra.mxu0 %v710
        %798 = vmatpush.bf16.msra.mxu0 %v709
        %799 = vmatmul.bf16.gmra.mxu0 %v787
        %v800 = vpop.f32.mrf.mxu0
        %v801 = vadd.f32 0.0, %v800
        %v802 = vpop.f32.mrf.mxu0
        %v803 = vadd.f32 0.0, %v802
        %804 = vmatmul.bf16.gmra.mxu0 %v788
        %v805 = vpop.f32.mrf.mxu0
        %v806 = vadd.f32 0.0, %v805
        %v807 = vpop.f32.mrf.mxu0
        %v808 = vadd.f32 0.0, %v807
        %809 = vmatmul.bf16.gmra.mxu0 %v789
        %v810 = vpop.f32.mrf.mxu0
        %v811 = vadd.f32 0.0, %v810
        %v812 = vpop.f32.mrf.mxu0
        %v813 = vadd.f32 0.0, %v812
        %814 = vmatmul.bf16.gmra.mxu0 %v790
        %v815 = vpop.f32.mrf.mxu0
        %v816 = vadd.f32 0.0, %v815
        %v817 = vpop.f32.mrf.mxu0
        %v818 = vadd.f32 0.0, %v817
        %819 = vdwg.mxu0
        %v820 = vadd.f32 %v735, %v768
        %v821 = vadd.f32 %v737, %v770
        %v822 = vadd.f32 %v740, %v773
        %v823 = vadd.f32 %v742, %v775
        %v824 = vadd.f32 %v745, %v778
        %v825 = vadd.f32 %v747, %v780
        %v826 = vadd.f32 %v750, %v783
        %v827 = vadd.f32 %v752, %v785
        %v828 = vmax.f32 %v735, %v768
        %v829 = vmax.f32 %v737, %v770
        %v830 = vmax.f32 %v740, %v773
        %v831 = vmax.f32 %v742, %v775
        %v832 = vmax.f32 %v745, %v778
        %v833 = vmax.f32 %v747, %v780
        %v834 = vmax.f32 %v750, %v783
        %v835 = vmax.f32 %v752, %v785
        %v836 = vmax.f32 %v820, %v801
        %v837 = vmax.f32 %v821, %v803
        %v838 = vmax.f32 %v822, %v806
        %v839 = vmax.f32 %v823, %v808
        %v840 = vmax.f32 %v824, %v811
        %v841 = vmax.f32 %v825, %v813
        %v842 = vmax.f32 %v826, %v816
        %v843 = vmax.f32 %v827, %v818
        %v844 = vmax.f32 %v828, %v836
        %v845 = vmax.f32 %v829, %v837
        %v846 = vmax.f32 %v830, %v838
        %v847 = vmax.f32 %v831, %v839
        %v848 = vmax.f32 %v832, %v840
        %v849 = vmax.f32 %v833, %v841
        %v850 = vmax.f32 %v834, %v842
        %v851 = vmax.f32 %v835, %v843
        %v852 = vsub.f32 %v735, %v844
        %v853 = vsub.f32 %v737, %v845
        %v854 = vsub.f32 %v740, %v846
        %v855 = vsub.f32 %v742, %v847
        %v856 = vsub.f32 %v745, %v848
        %v857 = vsub.f32 %v747, %v849
        %v858 = vsub.f32 %v750, %v850
        %v859 = vsub.f32 %v752, %v851
        %v860 = vmul.f32 %v852, 1.442695
        %v861 = vpow.pop %v860
        %v862 = vmul.f32 %v853, 1.442695
        %v863 = vpow.pop %v862
        %v864 = vmul.f32 %v854, 1.442695
        %v865 = vpow.pop %v864
        %v866 = vmul.f32 %v855, 1.442695
        %v867 = vpow.pop %v866
        %v868 = vmul.f32 %v856, 1.442695
        %v869 = vpow.pop %v868
        %v870 = vmul.f32 %v857, 1.442695
        %v871 = vpow.pop %v870
        %v872 = vmul.f32 %v858, 1.442695
        %v873 = vpow.pop %v872
        %v874 = vmul.f32 %v859, 1.442695
        %v875 = vpow.pop %v874
        %v876 = vsub.f32 %v768, %v844
        %v877 = vsub.f32 %v770, %v845
        %v878 = vsub.f32 %v773, %v846
        %v879 = vsub.f32 %v775, %v847
        %v880 = vsub.f32 %v778, %v848
        %v881 = vsub.f32 %v780, %v849
        %v882 = vsub.f32 %v783, %v850
        %v883 = vsub.f32 %v785, %v851
        %v884 = vmul.f32 %v876, 1.442695
        %v885 = vpow.pop %v884
        %v886 = vmul.f32 %v877, 1.442695
        %v887 = vpow.pop %v886
        %v888 = vmul.f32 %v878, 1.442695
        %v889 = vpow.pop %v888
        %v890 = vmul.f32 %v879, 1.442695
        %v891 = vpow.pop %v890
        %v892 = vmul.f32 %v880, 1.442695
        %v893 = vpow.pop %v892
        %v894 = vmul.f32 %v881, 1.442695
        %v895 = vpow.pop %v894
        %v896 = vmul.f32 %v882, 1.442695
        %v897 = vpow.pop %v896
        %v898 = vmul.f32 %v883, 1.442695
        %v899 = vpow.pop %v898
        %v900 = vsub.f32 %v820, %v844
        %v901 = vsub.f32 %v821, %v845
        %v902 = vsub.f32 %v822, %v846
        %v903 = vsub.f32 %v823, %v847
        %v904 = vsub.f32 %v824, %v848
        %v905 = vsub.f32 %v825, %v849
        %v906 = vsub.f32 %v826, %v850
        %v907 = vsub.f32 %v827, %v851
        %v908 = vmul.f32 %v900, 1.442695
        %v909 = vpow.pop %v908
        %v910 = vmul.f32 %v901, 1.442695
        %v911 = vpow.pop %v910
        %v912 = vmul.f32 %v902, 1.442695
        %v913 = vpow.pop %v912
        %v914 = vmul.f32 %v903, 1.442695
        %v915 = vpow.pop %v914
        %v916 = vmul.f32 %v904, 1.442695
        %v917 = vpow.pop %v916
        %v918 = vmul.f32 %v905, 1.442695
        %v919 = vpow.pop %v918
        %v920 = vmul.f32 %v906, 1.442695
        %v921 = vpow.pop %v920
        %v922 = vmul.f32 %v907, 1.442695
        %v923 = vpow.pop %v922
        %v924 = vsub.f32 %v801, %v844
        %v925 = vsub.f32 %v803, %v845
        %v926 = vsub.f32 %v806, %v846
        %v927 = vsub.f32 %v808, %v847
        %v928 = vsub.f32 %v811, %v848
        %v929 = vsub.f32 %v813, %v849
        %v930 = vsub.f32 %v816, %v850
        %v931 = vsub.f32 %v818, %v851
        %v932 = vmul.f32 %v924, 1.442695
        %v933 = vpow.pop %v932
        %v934 = vmul.f32 %v925, 1.442695
        %v935 = vpow.pop %v934
        %v936 = vmul.f32 %v926, 1.442695
        %v937 = vpow.pop %v936
        %v938 = vmul.f32 %v927, 1.442695
        %v939 = vpow.pop %v938
        %v940 = vmul.f32 %v928, 1.442695
        %v941 = vpow.pop %v940
        %v942 = vmul.f32 %v929, 1.442695
        %v943 = vpow.pop %v942
        %v944 = vmul.f32 %v930, 1.442695
        %v945 = vpow.pop %v944
        %v946 = vmul.f32 %v931, 1.442695
        %v947 = vpow.pop %v946
        %v948 = vadd.f32 %v861, %v885
        %v949 = vadd.f32 %v863, %v887
        %v950 = vadd.f32 %v865, %v889
        %v951 = vadd.f32 %v867, %v891
        %v952 = vadd.f32 %v869, %v893
        %v953 = vadd.f32 %v871, %v895
        %v954 = vadd.f32 %v873, %v897
        %v955 = vadd.f32 %v875, %v899
        %v956 = vadd.f32 %v948, %v909
        %v957 = vadd.f32 %v949, %v911
        %v958 = vadd.f32 %v950, %v913
        %v959 = vadd.f32 %v951, %v915
        %v960 = vadd.f32 %v952, %v917
        %v961 = vadd.f32 %v953, %v919
        %v962 = vadd.f32 %v954, %v921
        %v963 = vadd.f32 %v955, %v923
        %v964 = vadd.f32 %v956, %v933
        %v965 = vadd.f32 %v957, %v935
        %v966 = vadd.f32 %v958, %v937
        %v967 = vadd.f32 %v959, %v939
        %v968 = vadd.f32 %v960, %v941
        %v969 = vadd.f32 %v961, %v943
        %v970 = vadd.f32 %v962, %v945
        %v971 = vadd.f32 %v963, %v947
        %v972 = vrcp.pop %v964
        %v973 = vrcp.pop %v965
        %v974 = vrcp.pop %v966
        %v975 = vrcp.pop %v967
        %v976 = vrcp.pop %v968
        %v977 = vrcp.pop %v969
        %v978 = vrcp.pop %v970
        %v979 = vrcp.pop %v971
        %v980 = vadd.f32 %v861, %v909
        %v981 = vadd.f32 %v863, %v911
        %v982 = vadd.f32 %v865, %v913
        %v983 = vadd.f32 %v867, %v915
        %v984 = vadd.f32 %v869, %v917
        %v985 = vadd.f32 %v871, %v919
        %v986 = vadd.f32 %v873, %v921
        %v987 = vadd.f32 %v875, %v923
        %v988 = vmul.f32 %v933, %v453
        %v989 = vmul.f32 %v935, %v454
        %v990 = vmul.f32 %v937, %v455
        %v991 = vmul.f32 %v939, %v456
        %v992 = vmul.f32 %v941, %v457
        %v993 = vmul.f32 %v943, %v458
        %v994 = vmul.f32 %v945, %v459
        %v995 = vmul.f32 %v947, %v460
        %v996 = vadd.f32 %v980, %v988
        %v997 = vadd.f32 %v981, %v989
        %v998 = vadd.f32 %v982, %v990
        %v999 = vadd.f32 %v983, %v991
        %v1000 = vadd.f32 %v984, %v992
        %v1001 = vadd.f32 %v985, %v993
        %v1002 = vadd.f32 %v986, %v994
        %v1003 = vadd.f32 %v987, %v995
        %v1004 = vmul.f32 %v445, %v996
        %v1005 = vmul.f32 %v446, %v997
        %v1006 = vmul.f32 %v447, %v998
        %v1007 = vmul.f32 %v448, %v999
        %v1008 = vmul.f32 %v449, %v1000
        %v1009 = vmul.f32 %v450, %v1001
        %v1010 = vmul.f32 %v451, %v1002
        %v1011 = vmul.f32 %v452, %v1003
        %v1012 = vadd.f32 %v885, %v909
        %v1013 = vadd.f32 %v887, %v911
        %v1014 = vadd.f32 %v889, %v913
        %v1015 = vadd.f32 %v891, %v915
        %v1016 = vadd.f32 %v893, %v917
        %v1017 = vadd.f32 %v895, %v919
        %v1018 = vadd.f32 %v897, %v921
        %v1019 = vadd.f32 %v899, %v923
        %v1020 = vmul.f32 %v453, %v1012
        %v1021 = vmul.f32 %v454, %v1013
        %v1022 = vmul.f32 %v455, %v1014
        %v1023 = vmul.f32 %v456, %v1015
        %v1024 = vmul.f32 %v457, %v1016
        %v1025 = vmul.f32 %v458, %v1017
        %v1026 = vmul.f32 %v459, %v1018
        %v1027 = vmul.f32 %v460, %v1019
        %v1028 = vadd.f32 %v1004, %v1020
        %v1029 = vadd.f32 %v1005, %v1021
        %v1030 = vadd.f32 %v1006, %v1022
        %v1031 = vadd.f32 %v1007, %v1023
        %v1032 = vadd.f32 %v1008, %v1024
        %v1033 = vadd.f32 %v1009, %v1025
        %v1034 = vadd.f32 %v1010, %v1026
        %v1035 = vadd.f32 %v1011, %v1027
        %v1036 = vmul.f32 %v1028, %v972
        %v1037 = vmul.f32 %v1029, %v973
        %v1038 = vmul.f32 %v1030, %v974
        %v1039 = vmul.f32 %v1031, %v975
        %v1040 = vmul.f32 %v1032, %v976
        %v1041 = vmul.f32 %v1033, %v977
        %v1042 = vmul.f32 %v1034, %v978
        %v1043 = vmul.f32 %v1035, %v979
        %v1044 = vpack.c.bf16 %v1037, %v1036
        %v1045 = vpack.c.bf16 %v1039, %v1038
        %v1046 = vpack.c.bf16 %v1041, %v1040
        %v1047 = vpack.c.bf16 %v1043, %v1042
        %v1048 = vld [vmem:[#allocation11] sm:$0xf]
        %v1049 = vld [vmem:[#allocation11 + $0x4] sm:$0xf]
        %v1050 = vld [vmem:[#allocation11 + $0x8] sm:$0xf]
        %v1051 = vld [vmem:[#allocation11 + $0xc] sm:$0xf]
        %v1052 = vld [vmem:[#allocation11 + $0x10] sm:$0xf]
        %v1053 = vld [vmem:[#allocation11 + $0x14] sm:$0xf]
        %v1054 = vld [vmem:[#allocation11 + $0x18] sm:$0xf]
        %v1055 = vld [vmem:[#allocation11 + $0x1c] sm:$0xf]
        %v1056 = vld [vmem:[#allocation11 + $0x20] sm:$0xf]
        %v1057 = vld [vmem:[#allocation11 + $0x24] sm:$0xf]
        %v1058 = vld [vmem:[#allocation11 + $0x28] sm:$0xf]
        %v1059 = vld [vmem:[#allocation11 + $0x2c] sm:$0xf]
        %v1060 = vld [vmem:[#allocation11 + $0x30] sm:$0xf]
        %v1061 = vld [vmem:[#allocation11 + $0x34] sm:$0xf]
        %v1062 = vld [vmem:[#allocation11 + $0x38] sm:$0xf]
        %v1063 = vld [vmem:[#allocation11 + $0x3c] sm:$0xf]
        %v1064 = vperm.slane %v462, 0
        %v1081 = vunpack.c.l.b16 %v1048
        %v1082 = vunpack.c.l.b16 %v1049
        %v1083 = vunpack.c.l.b16 %v1050
        %v1084 = vunpack.c.l.b16 %v1051
        %v1085 = vunpack.c.l.b16 %v1052
        %v1086 = vunpack.c.l.b16 %v1053
        %v1087 = vunpack.c.l.b16 %v1054
        %v1088 = vunpack.c.l.b16 %v1055
        %v1089 = vunpack.c.l.b16 %v1056
        %v1090 = vunpack.c.l.b16 %v1057
        %v1091 = vunpack.c.l.b16 %v1058
        %v1092 = vunpack.c.l.b16 %v1059
        %v1093 = vunpack.c.l.b16 %v1060
        %v1094 = vunpack.c.l.b16 %v1061
        %v1095 = vunpack.c.l.b16 %v1062
        %v1096 = vunpack.c.l.b16 %v1063
        %v1097 = vpack.c.b16 %v1082, %v1081
        %v1098 = vpack.c.b16 %v1084, %v1083
        %v1099 = vpack.c.b16 %v1086, %v1085
        %v1100 = vpack.c.b16 %v1088, %v1087
        %v1101 = vpack.c.b16 %v1090, %v1089
        %v1102 = vpack.c.b16 %v1092, %v1091
        %v1103 = vpack.c.b16 %v1094, %v1093
        %v1104 = vpack.c.b16 %v1096, %v1095
        %1113 = vmatpush.bf16.msra.mxu0 %v1104
        %1114 = vmatpush.bf16.msra.mxu0 %v1103
        %1115 = vmatpush.bf16.msra.mxu0 %v1102
        %1116 = vmatpush.bf16.msra.mxu0 %v1101
        %1117 = vmatpush.bf16.msra.mxu0 %v1100
        %1118 = vmatpush.bf16.msra.mxu0 %v1099
        %1119 = vmatpush.bf16.msra.mxu0 %v1098
        %1120 = vmatpush.bf16.msra.mxu0 %v1097
        %1121 = vmatmul.bf16.gmra.mxu0 %v1044
        %v1122 = vpop.f32.mrf.mxu0
        %v1123 = vadd.f32 %v1064, %v1122
        %v1124 = vpop.f32.mrf.mxu0
        %v1125 = vadd.f32 %v1064, %v1124
        %1126 = vmatmul.bf16.gmra.mxu0 %v1045
        %v1127 = vpop.f32.mrf.mxu0
        %v1128 = vadd.f32 %v1064, %v1127
        %v1129 = vpop.f32.mrf.mxu0
        %v1130 = vadd.f32 %v1064, %v1129
        %1131 = vmatmul.bf16.gmra.mxu0 %v1046
        %v1132 = vpop.f32.mrf.mxu0
        %v1133 = vadd.f32 %v1064, %v1132
        %v1134 = vpop.f32.mrf.mxu0
        %v1135 = vadd.f32 %v1064, %v1134
        %1136 = vmatmul.bf16.gmra.mxu0 %v1047
        %v1137 = vpop.f32.mrf.mxu0
        %v1138 = vadd.f32 %v1064, %v1137
        %v1139 = vpop.f32.mrf.mxu0
        %v1140 = vadd.f32 %v1064, %v1139
        %1141 = vdwg.mxu0
        %v1142 = vmul.f32 %v1123, 0.5
        %v1143 = vmul.f32 %v1125, 0.5
        %v1144 = vmul.f32 %v1128, 0.5
        %v1145 = vmul.f32 %v1130, 0.5
        %v1146 = vmul.f32 %v1133, 0.5
        %v1147 = vmul.f32 %v1135, 0.5
        %v1148 = vmul.f32 %v1138, 0.5
        %v1149 = vmul.f32 %v1140, 0.5
        %v1150 = vmul.f32 %v1123, 0.70710677
        %v1151 = vmul.f32 %v1125, 0.70710677
        %v1152 = vmul.f32 %v1128, 0.70710677
        %v1153 = vmul.f32 %v1130, 0.70710677
        %v1154 = vmul.f32 %v1133, 0.70710677
        %v1155 = vmul.f32 %v1135, 0.70710677
        %v1156 = vmul.f32 %v1138, 0.70710677
        %v1157 = vmul.f32 %v1140, 0.70710677
        %v1158 = vmul.f32 %v1150, %v1150
        %v1159 = vmin.f32 16.0, %v1158
        %v1160 = vmul.f32 %v1159, 2.1237322e-06
        %v1161 = vadd.f32 %v1160, 0.00028619796
        %v1162 = vmul.f32 %v1159, %v1161
        %v1163 = vadd.f32 %v1162, 0.0036580483
        %v1164 = vmul.f32 %v1159, %v1163
        %v1165 = vadd.f32 %v1164, 0.05243302
        %v1166 = vmul.f32 %v1159, %v1165
        %v1167 = vadd.f32 %v1166, 0.18741608
        %v1168 = vmul.f32 %v1159, %v1167
        %v1169 = vadd.f32 %v1168, 1.1283791
        %v1170 = vmul.f32 %v1150, %v1169
        %v1171 = vmul.f32 %v1159, 3.8918573e-05
        %v1172 = vadd.f32 %v1171, 0.001143296
        %v1173 = vmul.f32 %v1159, %v1172
        %v1174 = vadd.f32 %v1173, 0.014752088
        %v1175 = vmul.f32 %v1159, %v1174
        %v1176 = vadd.f32 %v1175, 0.112945676
        %v1177 = vmul.f32 %v1159, %v1176
        %v1178 = vadd.f32 %v1177, 0.4994258
        %v1179 = vmul.f32 %v1159, %v1178
        %v1180 = vadd.f32 %v1179, 1.0
        %v1181 = vrcp.pop %v1180
        %v1182 = vmul.f32 %v1180, %v1181
        %v1183 = vsub.f32 1.0, %v1182
        %v1184 = vmul.f32 %v1181, %v1183
        %v1185 = vadd.f32 %v1181, %v1184
        %vm1186 = vweird.f32 %v1180
        %vm1187 = vweird.f32 %v1181
        %vm1188 = vmor %vm1186, %vm1187
        %v1189 = vsel %vm1188, %v1181, %v1185
        %v1190 = vand.u32 2147483647, %v1180
        %vm1191 = vcmp.eq.f32.partialorder %v1190, 8.507059e+37
        %v1192 = vand.u32 %v1180, 2147483648
        %v1193 = vor.u32 1.1754944e-38, %v1192
        %v1194 = vsel %vm1191, %v1193, %v1189
        %v1195 = vmul.f32 %v1170, %v1194
        %v1196 = vmin.f32 %v1195, 1.0
        %v1197 = vmax.f32 %v1196, -1.0
        %v1198 = vmul.f32 %v1151, %v1151
        %v1199 = vmin.f32 16.0, %v1198
        %v1200 = vmul.f32 %v1199, 2.1237322e-06
        %v1201 = vadd.f32 %v1200, 0.00028619796
        %v1202 = vmul.f32 %v1199, %v1201
        %v1203 = vadd.f32 %v1202, 0.0036580483
        %v1204 = vmul.f32 %v1199, %v1203
        %v1205 = vadd.f32 %v1204, 0.05243302
        %v1206 = vmul.f32 %v1199, %v1205
        %v1207 = vadd.f32 %v1206, 0.18741608
        %v1208 = vmul.f32 %v1199, %v1207
        %v1209 = vadd.f32 %v1208, 1.1283791
        %v1210 = vmul.f32 %v1151, %v1209
        %v1211 = vmul.f32 %v1199, 3.8918573e-05
        %v1212 = vadd.f32 %v1211, 0.001143296
        %v1213 = vmul.f32 %v1199, %v1212
        %v1214 = vadd.f32 %v1213, 0.014752088
        %v1215 = vmul.f32 %v1199, %v1214
        %v1216 = vadd.f32 %v1215, 0.112945676
        %v1217 = vmul.f32 %v1199, %v1216
        %v1218 = vadd.f32 %v1217, 0.4994258
        %v1219 = vmul.f32 %v1199, %v1218
        %v1220 = vadd.f32 %v1219, 1.0
        %v1221 = vrcp.pop %v1220
        %v1222 = vmul.f32 %v1220, %v1221
        %v1223 = vsub.f32 1.0, %v1222
        %v1224 = vmul.f32 %v1221, %v1223
        %v1225 = vadd.f32 %v1221, %v1224
        %vm1226 = vweird.f32 %v1220
        %vm1227 = vweird.f32 %v1221
        %vm1228 = vmor %vm1226, %vm1227
        %v1229 = vsel %vm1228, %v1221, %v1225
        %v1230 = vand.u32 2147483647, %v1220
        %vm1231 = vcmp.eq.f32.partialorder %v1230, 8.507059e+37
        %v1232 = vand.u32 %v1220, 2147483648
        %v1233 = vor.u32 1.1754944e-38, %v1232
        %v1234 = vsel %vm1231, %v1233, %v1229
        %v1235 = vmul.f32 %v1210, %v1234
        %v1236 = vmin.f32 %v1235, 1.0
        %v1237 = vmax.f32 %v1236, -1.0
        %v1238 = vmul.f32 %v1152, %v1152
        %v1239 = vmin.f32 16.0, %v1238
        %v1240 = vmul.f32 %v1239, 2.1237322e-06
        %v1241 = vadd.f32 %v1240, 0.00028619796
        %v1242 = vmul.f32 %v1239, %v1241
        %v1243 = vadd.f32 %v1242, 0.0036580483
        %v1244 = vmul.f32 %v1239, %v1243
        %v1245 = vadd.f32 %v1244, 0.05243302
        %v1246 = vmul.f32 %v1239, %v1245
        %v1247 = vadd.f32 %v1246, 0.18741608
        %v1248 = vmul.f32 %v1239, %v1247
        %v1249 = vadd.f32 %v1248, 1.1283791
        %v1250 = vmul.f32 %v1152, %v1249
        %v1251 = vmul.f32 %v1239, 3.8918573e-05
        %v1252 = vadd.f32 %v1251, 0.001143296
        %v1253 = vmul.f32 %v1239, %v1252
        %v1254 = vadd.f32 %v1253, 0.014752088
        %v1255 = vmul.f32 %v1239, %v1254
        %v1256 = vadd.f32 %v1255, 0.112945676
        %v1257 = vmul.f32 %v1239, %v1256
        %v1258 = vadd.f32 %v1257, 0.4994258
        %v1259 = vmul.f32 %v1239, %v1258
        %v1260 = vadd.f32 %v1259, 1.0
        %v1261 = vrcp.pop %v1260
        %v1262 = vmul.f32 %v1260, %v1261
        %v1263 = vsub.f32 1.0, %v1262
        %v1264 = vmul.f32 %v1261, %v1263
        %v1265 = vadd.f32 %v1261, %v1264
        %vm1266 = vweird.f32 %v1260
        %vm1267 = vweird.f32 %v1261
        %vm1268 = vmor %vm1266, %vm1267
        %v1269 = vsel %vm1268, %v1261, %v1265
        %v1270 = vand.u32 2147483647, %v1260
        %vm1271 = vcmp.eq.f32.partialorder %v1270, 8.507059e+37
        %v1272 = vand.u32 %v1260, 2147483648
        %v1273 = vor.u32 1.1754944e-38, %v1272
        %v1274 = vsel %vm1271, %v1273, %v1269
        %v1275 = vmul.f32 %v1250, %v1274
        %v1276 = vmin.f32 %v1275, 1.0
        %v1277 = vmax.f32 %v1276, -1.0
        %v1278 = vmul.f32 %v1153, %v1153
        %v1279 = vmin.f32 16.0, %v1278
        %v1280 = vmul.f32 %v1279, 2.1237322e-06
        %v1281 = vadd.f32 %v1280, 0.00028619796
        %v1282 = vmul.f32 %v1279, %v1281
        %v1283 = vadd.f32 %v1282, 0.0036580483
        %v1284 = vmul.f32 %v1279, %v1283
        %v1285 = vadd.f32 %v1284, 0.05243302
        %v1286 = vmul.f32 %v1279, %v1285
        %v1287 = vadd.f32 %v1286, 0.18741608
        %v1288 = vmul.f32 %v1279, %v1287
        %v1289 = vadd.f32 %v1288, 1.1283791
        %v1290 = vmul.f32 %v1153, %v1289
        %v1291 = vmul.f32 %v1279, 3.8918573e-05
        %v1292 = vadd.f32 %v1291, 0.001143296
        %v1293 = vmul.f32 %v1279, %v1292
        %v1294 = vadd.f32 %v1293, 0.014752088
        %v1295 = vmul.f32 %v1279, %v1294
        %v1296 = vadd.f32 %v1295, 0.112945676
        %v1297 = vmul.f32 %v1279, %v1296
        %v1298 = vadd.f32 %v1297, 0.4994258
        %v1299 = vmul.f32 %v1279, %v1298
        %v1300 = vadd.f32 %v1299, 1.0
        %v1301 = vrcp.pop %v1300
        %v1302 = vmul.f32 %v1300, %v1301
        %v1303 = vsub.f32 1.0, %v1302
        %v1304 = vmul.f32 %v1301, %v1303
        %v1305 = vadd.f32 %v1301, %v1304
        %vm1306 = vweird.f32 %v1300
        %vm1307 = vweird.f32 %v1301
        %vm1308 = vmor %vm1306, %vm1307
        %v1309 = vsel %vm1308, %v1301, %v1305
        %v1310 = vand.u32 2147483647, %v1300
        %vm1311 = vcmp.eq.f32.partialorder %v1310, 8.507059e+37
        %v1312 = vand.u32 %v1300, 2147483648
        %v1313 = vor.u32 1.1754944e-38, %v1312
        %v1314 = vsel %vm1311, %v1313, %v1309
        %v1315 = vmul.f32 %v1290, %v1314
        %v1316 = vmin.f32 %v1315, 1.0
        %v1317 = vmax.f32 %v1316, -1.0
        %v1318 = vmul.f32 %v1154, %v1154
        %v1319 = vmin.f32 16.0, %v1318
        %v1320 = vmul.f32 %v1319, 2.1237322e-06
        %v1321 = vadd.f32 %v1320, 0.00028619796
        %v1322 = vmul.f32 %v1319, %v1321
        %v1323 = vadd.f32 %v1322, 0.0036580483
        %v1324 = vmul.f32 %v1319, %v1323
        %v1325 = vadd.f32 %v1324, 0.05243302
        %v1326 = vmul.f32 %v1319, %v1325
        %v1327 = vadd.f32 %v1326, 0.18741608
        %v1328 = vmul.f32 %v1319, %v1327
        %v1329 = vadd.f32 %v1328, 1.1283791
        %v1330 = vmul.f32 %v1154, %v1329
        %v1331 = vmul.f32 %v1319, 3.8918573e-05
        %v1332 = vadd.f32 %v1331, 0.001143296
        %v1333 = vmul.f32 %v1319, %v1332
        %v1334 = vadd.f32 %v1333, 0.014752088
        %v1335 = vmul.f32 %v1319, %v1334
        %v1336 = vadd.f32 %v1335, 0.112945676
        %v1337 = vmul.f32 %v1319, %v1336
        %v1338 = vadd.f32 %v1337, 0.4994258
        %v1339 = vmul.f32 %v1319, %v1338
        %v1340 = vadd.f32 %v1339, 1.0
        %v1341 = vrcp.pop %v1340
        %v1342 = vmul.f32 %v1340, %v1341
        %v1343 = vsub.f32 1.0, %v1342
        %v1344 = vmul.f32 %v1341, %v1343
        %v1345 = vadd.f32 %v1341, %v1344
        %vm1346 = vweird.f32 %v1340
        %vm1347 = vweird.f32 %v1341
        %vm1348 = vmor %vm1346, %vm1347
        %v1349 = vsel %vm1348, %v1341, %v1345
        %v1350 = vand.u32 2147483647, %v1340
        %vm1351 = vcmp.eq.f32.partialorder %v1350, 8.507059e+37
        %v1352 = vand.u32 %v1340, 2147483648
        %v1353 = vor.u32 1.1754944e-38, %v1352
        %v1354 = vsel %vm1351, %v1353, %v1349
        %v1355 = vmul.f32 %v1330, %v1354
        %v1356 = vmin.f32 %v1355, 1.0
        %v1357 = vmax.f32 %v1356, -1.0
        %v1358 = vmul.f32 %v1155, %v1155
        %v1359 = vmin.f32 16.0, %v1358
        %v1360 = vmul.f32 %v1359, 2.1237322e-06
        %v1361 = vadd.f32 %v1360, 0.00028619796
        %v1362 = vmul.f32 %v1359, %v1361
        %v1363 = vadd.f32 %v1362, 0.0036580483
        %v1364 = vmul.f32 %v1359, %v1363
        %v1365 = vadd.f32 %v1364, 0.05243302
        %v1366 = vmul.f32 %v1359, %v1365
        %v1367 = vadd.f32 %v1366, 0.18741608
        %v1368 = vmul.f32 %v1359, %v1367
        %v1369 = vadd.f32 %v1368, 1.1283791
        %v1370 = vmul.f32 %v1155, %v1369
        %v1371 = vmul.f32 %v1359, 3.8918573e-05
        %v1372 = vadd.f32 %v1371, 0.001143296
        %v1373 = vmul.f32 %v1359, %v1372
        %v1374 = vadd.f32 %v1373, 0.014752088
        %v1375 = vmul.f32 %v1359, %v1374
        %v1376 = vadd.f32 %v1375, 0.112945676
        %v1377 = vmul.f32 %v1359, %v1376
        %v1378 = vadd.f32 %v1377, 0.4994258
        %v1379 = vmul.f32 %v1359, %v1378
        %v1380 = vadd.f32 %v1379, 1.0
        %v1381 = vrcp.pop %v1380
        %v1382 = vmul.f32 %v1380, %v1381
        %v1383 = vsub.f32 1.0, %v1382
        %v1384 = vmul.f32 %v1381, %v1383
        %v1385 = vadd.f32 %v1381, %v1384
        %vm1386 = vweird.f32 %v1380
        %vm1387 = vweird.f32 %v1381
        %vm1388 = vmor %vm1386, %vm1387
        %v1389 = vsel %vm1388, %v1381, %v1385
        %v1390 = vand.u32 2147483647, %v1380
        %vm1391 = vcmp.eq.f32.partialorder %v1390, 8.507059e+37
        %v1392 = vand.u32 %v1380, 2147483648
        %v1393 = vor.u32 1.1754944e-38, %v1392
        %v1394 = vsel %vm1391, %v1393, %v1389
        %v1395 = vmul.f32 %v1370, %v1394
        %v1396 = vmin.f32 %v1395, 1.0
        %v1397 = vmax.f32 %v1396, -1.0
        %v1398 = vmul.f32 %v1156, %v1156
        %v1399 = vmin.f32 16.0, %v1398
        %v1400 = vmul.f32 %v1399, 2.1237322e-06
        %v1401 = vadd.f32 %v1400, 0.00028619796
        %v1402 = vmul.f32 %v1399, %v1401
        %v1403 = vadd.f32 %v1402, 0.0036580483
        %v1404 = vmul.f32 %v1399, %v1403
        %v1405 = vadd.f32 %v1404, 0.05243302
        %v1406 = vmul.f32 %v1399, %v1405
        %v1407 = vadd.f32 %v1406, 0.18741608
        %v1408 = vmul.f32 %v1399, %v1407
        %v1409 = vadd.f32 %v1408, 1.1283791
        %v1410 = vmul.f32 %v1156, %v1409
        %v1411 = vmul.f32 %v1399, 3.8918573e-05
        %v1412 = vadd.f32 %v1411, 0.001143296
        %v1413 = vmul.f32 %v1399, %v1412
        %v1414 = vadd.f32 %v1413, 0.014752088
        %v1415 = vmul.f32 %v1399, %v1414
        %v1416 = vadd.f32 %v1415, 0.112945676
        %v1417 = vmul.f32 %v1399, %v1416
        %v1418 = vadd.f32 %v1417, 0.4994258
        %v1419 = vmul.f32 %v1399, %v1418
        %v1420 = vadd.f32 %v1419, 1.0
        %v1421 = vrcp.pop %v1420
        %v1422 = vmul.f32 %v1420, %v1421
        %v1423 = vsub.f32 1.0, %v1422
        %v1424 = vmul.f32 %v1421, %v1423
        %v1425 = vadd.f32 %v1421, %v1424
        %vm1426 = vweird.f32 %v1420
        %vm1427 = vweird.f32 %v1421
        %vm1428 = vmor %vm1426, %vm1427
        %v1429 = vsel %vm1428, %v1421, %v1425
        %v1430 = vand.u32 2147483647, %v1420
        %vm1431 = vcmp.eq.f32.partialorder %v1430, 8.507059e+37
        %v1432 = vand.u32 %v1420, 2147483648
        %v1433 = vor.u32 1.1754944e-38, %v1432
        %v1434 = vsel %vm1431, %v1433, %v1429
        %v1435 = vmul.f32 %v1410, %v1434
        %v1436 = vmin.f32 %v1435, 1.0
        %v1437 = vmax.f32 %v1436, -1.0
        %v1438 = vmul.f32 %v1157, %v1157
        %v1439 = vmin.f32 16.0, %v1438
        %v1440 = vmul.f32 %v1439, 2.1237322e-06
        %v1441 = vadd.f32 %v1440, 0.00028619796
        %v1442 = vmul.f32 %v1439, %v1441
        %v1443 = vadd.f32 %v1442, 0.0036580483
        %v1444 = vmul.f32 %v1439, %v1443
        %v1445 = vadd.f32 %v1444, 0.05243302
        %v1446 = vmul.f32 %v1439, %v1445
        %v1447 = vadd.f32 %v1446, 0.18741608
        %v1448 = vmul.f32 %v1439, %v1447
        %v1449 = vadd.f32 %v1448, 1.1283791
        %v1450 = vmul.f32 %v1157, %v1449
        %v1451 = vmul.f32 %v1439, 3.8918573e-05
        %v1452 = vadd.f32 %v1451, 0.001143296
        %v1453 = vmul.f32 %v1439, %v1452
        %v1454 = vadd.f32 %v1453, 0.014752088
        %v1455 = vmul.f32 %v1439, %v1454
        %v1456 = vadd.f32 %v1455, 0.112945676
        %v1457 = vmul.f32 %v1439, %v1456
        %v1458 = vadd.f32 %v1457, 0.4994258
        %v1459 = vmul.f32 %v1439, %v1458
        %v1460 = vadd.f32 %v1459, 1.0
        %v1461 = vrcp.pop %v1460
        %v1462 = vmul.f32 %v1460, %v1461
        %v1463 = vsub.f32 1.0, %v1462
        %v1464 = vmul.f32 %v1461, %v1463
        %v1465 = vadd.f32 %v1461, %v1464
        %vm1466 = vweird.f32 %v1460
        %vm1467 = vweird.f32 %v1461
        %vm1468 = vmor %vm1466, %vm1467
        %v1469 = vsel %vm1468, %v1461, %v1465
        %v1470 = vand.u32 2147483647, %v1460
        %vm1471 = vcmp.eq.f32.partialorder %v1470, 8.507059e+37
        %v1472 = vand.u32 %v1460, 2147483648
        %v1473 = vor.u32 1.1754944e-38, %v1472
        %v1474 = vsel %vm1471, %v1473, %v1469
        %v1475 = vmul.f32 %v1450, %v1474
        %v1476 = vmin.f32 %v1475, 1.0
        %v1477 = vmax.f32 %v1476, -1.0
        %v1478 = vadd.f32 %v1197, 1.0
        %v1479 = vadd.f32 %v1237, 1.0
        %v1480 = vadd.f32 %v1277, 1.0
        %v1481 = vadd.f32 %v1317, 1.0
        %v1482 = vadd.f32 %v1357, 1.0
        %v1483 = vadd.f32 %v1397, 1.0
        %v1484 = vadd.f32 %v1437, 1.0
        %v1485 = vadd.f32 %v1477, 1.0
        %v1486 = vmul.f32 %v1142, %v1478
        %v1487 = vmul.f32 %v1143, %v1479
        %v1488 = vmul.f32 %v1144, %v1480
        %v1489 = vmul.f32 %v1145, %v1481
        %v1490 = vmul.f32 %v1146, %v1482
        %v1491 = vmul.f32 %v1147, %v1483
        %v1492 = vmul.f32 %v1148, %v1484
        %v1493 = vmul.f32 %v1149, %v1485
        %v1494 = vpack.c.bf16 %v1487, %v1486
        %v1495 = vpack.c.bf16 %v1489, %v1488
        %v1496 = vpack.c.bf16 %v1491, %v1490
        %v1497 = vpack.c.bf16 %v1493, %v1492
        %v1498 = vld [vmem:[#allocation12] sm:$0xf]
        %v1499 = vld [vmem:[#allocation12 + $0x4] sm:$0xf]
        %v1500 = vld [vmem:[#allocation12 + $0x8] sm:$0xf]
        %v1501 = vld [vmem:[#allocation12 + $0xc] sm:$0xf]
        %v1502 = vld [vmem:[#allocation12 + $0x10] sm:$0xf]
        %v1503 = vld [vmem:[#allocation12 + $0x14] sm:$0xf]
        %v1504 = vld [vmem:[#allocation12 + $0x18] sm:$0xf]
        %v1505 = vld [vmem:[#allocation12 + $0x1c] sm:$0xf]
        %v1506 = vld [vmem:[#allocation12 + $0x20] sm:$0xf]
        %v1507 = vld [vmem:[#allocation12 + $0x24] sm:$0xf]
        %v1508 = vld [vmem:[#allocation12 + $0x28] sm:$0xf]
        %v1509 = vld [vmem:[#allocation12 + $0x2c] sm:$0xf]
        %v1510 = vld [vmem:[#allocation12 + $0x30] sm:$0xf]
        %v1511 = vld [vmem:[#allocation12 + $0x34] sm:$0xf]
        %v1512 = vld [vmem:[#allocation12 + $0x38] sm:$0xf]
        %v1513 = vld [vmem:[#allocation12 + $0x3c] sm:$0xf]
        %v1530 = vunpack.c.l.b16 %v1498
        %v1531 = vunpack.c.l.b16 %v1499
        %v1532 = vunpack.c.l.b16 %v1500
        %v1533 = vunpack.c.l.b16 %v1501
        %v1534 = vunpack.c.l.b16 %v1502
        %v1535 = vunpack.c.l.b16 %v1503
        %v1536 = vunpack.c.l.b16 %v1504
        %v1537 = vunpack.c.l.b16 %v1505
        %v1538 = vunpack.c.l.b16 %v1506
        %v1539 = vunpack.c.l.b16 %v1507
        %v1540 = vunpack.c.l.b16 %v1508
        %v1541 = vunpack.c.l.b16 %v1509
        %v1542 = vunpack.c.l.b16 %v1510
        %v1543 = vunpack.c.l.b16 %v1511
        %v1544 = vunpack.c.l.b16 %v1512
        %v1545 = vunpack.c.l.b16 %v1513
        %v1546 = vpack.c.b16 %v1531, %v1530
        %v1547 = vpack.c.b16 %v1533, %v1532
        %v1548 = vpack.c.b16 %v1535, %v1534
        %v1549 = vpack.c.b16 %v1537, %v1536
        %v1550 = vpack.c.b16 %v1539, %v1538
        %v1551 = vpack.c.b16 %v1541, %v1540
        %v1552 = vpack.c.b16 %v1543, %v1542
        %v1553 = vpack.c.b16 %v1545, %v1544
        %1562 = vmatpush.bf16.msra.mxu0 %v1553
        %1563 = vmatpush.bf16.msra.mxu0 %v1552
        %1564 = vmatpush.bf16.msra.mxu0 %v1551
        %1565 = vmatpush.bf16.msra.mxu0 %v1550
        %1566 = vmatpush.bf16.msra.mxu0 %v1549
        %1567 = vmatpush.bf16.msra.mxu0 %v1548
        %1568 = vmatpush.bf16.msra.mxu0 %v1547
        %1569 = vmatpush.bf16.msra.mxu0 %v1546
        %1570 = vmatmul.bf16.gmra.mxu0 %v1494
        %v1571 = vpop.f32.mrf.mxu0
        %v1572 = vadd.f32 0.0, %v1571
        %v1573 = vpop.f32.mrf.mxu0
        %v1574 = vadd.f32 0.0, %v1573
        %1575 = vmatmul.bf16.gmra.mxu0 %v1495
        %v1576 = vpop.f32.mrf.mxu0
        %v1577 = vadd.f32 0.0, %v1576
        %v1578 = vpop.f32.mrf.mxu0
        %v1579 = vadd.f32 0.0, %v1578
        %1580 = vmatmul.bf16.gmra.mxu0 %v1496
        %v1581 = vpop.f32.mrf.mxu0
        %v1582 = vadd.f32 0.0, %v1581
        %v1583 = vpop.f32.mrf.mxu0
        %v1584 = vadd.f32 0.0, %v1583
        %1585 = vmatmul.bf16.gmra.mxu0 %v1497
        %v1586 = vpop.f32.mrf.mxu0
        %v1587 = vadd.f32 0.0, %v1586
        %v1588 = vpop.f32.mrf.mxu0
        %v1589 = vadd.f32 0.0, %v1588
        %1590 = vdwg.mxu0
        %v1591 = vadd.f32 %v621, %v1572
        %v1592 = vadd.f32 %v623, %v1574
        %v1593 = vadd.f32 %v626, %v1577
        %v1594 = vadd.f32 %v628, %v1579
        %v1595 = vadd.f32 %v631, %v1582
        %v1596 = vadd.f32 %v633, %v1584
        %v1597 = vadd.f32 %v636, %v1587
        %v1598 = vadd.f32 %v638, %v1589
        %v1599 = vperm.slane %v463, 0
        %v1600 = vadd.f32 %v1591, %v1599
        %v1601 = vadd.f32 %v1592, %v1599
        %v1602 = vadd.f32 %v1593, %v1599
        %v1603 = vadd.f32 %v1594, %v1599
        %v1604 = vadd.f32 %v1595, %v1599
        %v1605 = vadd.f32 %v1596, %v1599
        %v1606 = vadd.f32 %v1597, %v1599
        %v1607 = vadd.f32 %v1598, %v1599
        %v1608 = vxor.u32 %v1600, 2147483648
        %v1609 = vxor.u32 %v1601, 2147483648
        %v1610 = vxor.u32 %v1602, 2147483648
        %v1611 = vxor.u32 %v1603, 2147483648
        %v1612 = vxor.u32 %v1604, 2147483648
        %v1613 = vxor.u32 %v1605, 2147483648
        %v1614 = vxor.u32 %v1606, 2147483648
        %v1615 = vxor.u32 %v1607, 2147483648
        %v1616 = vmul.f32 %v1608, 1.442695
        %v1617 = vpow.pop %v1616
        %v1618 = vmul.f32 %v1609, 1.442695
        %v1619 = vpow.pop %v1618
        %v1620 = vmul.f32 %v1610, 1.442695
        %v1621 = vpow.pop %v1620
        %v1622 = vmul.f32 %v1611, 1.442695
        %v1623 = vpow.pop %v1622
        %v1624 = vmul.f32 %v1612, 1.442695
        %v1625 = vpow.pop %v1624
        %v1626 = vmul.f32 %v1613, 1.442695
        %v1627 = vpow.pop %v1626
        %v1628 = vmul.f32 %v1614, 1.442695
        %v1629 = vpow.pop %v1628
        %v1630 = vmul.f32 %v1615, 1.442695
        %v1631 = vpow.pop %v1630
        %v1632 = vadd.f32 %v1617, 1.0
        %v1633 = vadd.f32 %v1619, 1.0
        %v1634 = vadd.f32 %v1621, 1.0
        %v1635 = vadd.f32 %v1623, 1.0
        %v1636 = vadd.f32 %v1625, 1.0
        %v1637 = vadd.f32 %v1627, 1.0
        %v1638 = vadd.f32 %v1629, 1.0
        %v1639 = vadd.f32 %v1631, 1.0
        %v1640 = vrcp.pop %v1632
        %v1641 = vmul.f32 %v1632, %v1640
        %v1642 = vsub.f32 1.0, %v1641
        %v1643 = vmul.f32 %v1640, %v1642
        %v1644 = vadd.f32 %v1640, %v1643
        %vm1645 = vweird.f32 %v1632
        %vm1646 = vweird.f32 %v1640
        %vm1647 = vmor %vm1645, %vm1646
        %v1648 = vsel %vm1647, %v1640, %v1644
        %v1649 = vand.u32 2147483647, %v1632
        %vm1650 = vcmp.eq.f32.partialorder %v1649, 8.507059e+37
        %v1651 = vand.u32 %v1632, 2147483648
        %v1652 = vor.u32 1.1754944e-38, %v1651
        %v1653 = vsel %vm1650, %v1652, %v1648
        %v1654 = vmul.f32 1.0, %v1653
        %v1655 = vrcp.pop %v1633
        %v1656 = vmul.f32 %v1633, %v1655
        %v1657 = vsub.f32 1.0, %v1656
        %v1658 = vmul.f32 %v1655, %v1657
        %v1659 = vadd.f32 %v1655, %v1658
        %vm1660 = vweird.f32 %v1633
        %vm1661 = vweird.f32 %v1655
        %vm1662 = vmor %vm1660, %vm1661
        %v1663 = vsel %vm1662, %v1655, %v1659
        %v1664 = vand.u32 2147483647, %v1633
        %vm1665 = vcmp.eq.f32.partialorder %v1664, 8.507059e+37
        %v1666 = vand.u32 %v1633, 2147483648
        %v1667 = vor.u32 1.1754944e-38, %v1666
        %v1668 = vsel %vm1665, %v1667, %v1663
        %v1669 = vmul.f32 1.0, %v1668
        %v1670 = vrcp.pop %v1634
        %v1671 = vmul.f32 %v1634, %v1670
        %v1672 = vsub.f32 1.0, %v1671
        %v1673 = vmul.f32 %v1670, %v1672
        %v1674 = vadd.f32 %v1670, %v1673
        %vm1675 = vweird.f32 %v1634
        %vm1676 = vweird.f32 %v1670
        %vm1677 = vmor %vm1675, %vm1676
        %v1678 = vsel %vm1677, %v1670, %v1674
        %v1679 = vand.u32 2147483647, %v1634
        %vm1680 = vcmp.eq.f32.partialorder %v1679, 8.507059e+37
        %v1681 = vand.u32 %v1634, 2147483648
        %v1682 = vor.u32 1.1754944e-38, %v1681
        %v1683 = vsel %vm1680, %v1682, %v1678
        %v1684 = vmul.f32 1.0, %v1683
        %v1685 = vrcp.pop %v1635
        %v1686 = vmul.f32 %v1635, %v1685
        %v1687 = vsub.f32 1.0, %v1686
        %v1688 = vmul.f32 %v1685, %v1687
        %v1689 = vadd.f32 %v1685, %v1688
        %vm1690 = vweird.f32 %v1635
        %vm1691 = vweird.f32 %v1685
        %vm1692 = vmor %vm1690, %vm1691
        %v1693 = vsel %vm1692, %v1685, %v1689
        %v1694 = vand.u32 2147483647, %v1635
        %vm1695 = vcmp.eq.f32.partialorder %v1694, 8.507059e+37
        %v1696 = vand.u32 %v1635, 2147483648
        %v1697 = vor.u32 1.1754944e-38, %v1696
        %v1698 = vsel %vm1695, %v1697, %v1693
        %v1699 = vmul.f32 1.0, %v1698
        %v1700 = vrcp.pop %v1636
        %v1701 = vmul.f32 %v1636, %v1700
        %v1702 = vsub.f32 1.0, %v1701
        %v1703 = vmul.f32 %v1700, %v1702
        %v1704 = vadd.f32 %v1700, %v1703
        %vm1705 = vweird.f32 %v1636
        %vm1706 = vweird.f32 %v1700
        %vm1707 = vmor %vm1705, %vm1706
        %v1708 = vsel %vm1707, %v1700, %v1704
        %v1709 = vand.u32 2147483647, %v1636
        %vm1710 = vcmp.eq.f32.partialorder %v1709, 8.507059e+37
        %v1711 = vand.u32 %v1636, 2147483648
        %v1712 = vor.u32 1.1754944e-38, %v1711
        %v1713 = vsel %vm1710, %v1712, %v1708
        %v1714 = vmul.f32 1.0, %v1713
        %v1715 = vrcp.pop %v1637
        %v1716 = vmul.f32 %v1637, %v1715
        %v1717 = vsub.f32 1.0, %v1716
        %v1718 = vmul.f32 %v1715, %v1717
        %v1719 = vadd.f32 %v1715, %v1718
        %vm1720 = vweird.f32 %v1637
        %vm1721 = vweird.f32 %v1715
        %vm1722 = vmor %vm1720, %vm1721
        %v1723 = vsel %vm1722, %v1715, %v1719
        %v1724 = vand.u32 2147483647, %v1637
        %vm1725 = vcmp.eq.f32.partialorder %v1724, 8.507059e+37
        %v1726 = vand.u32 %v1637, 2147483648
        %v1727 = vor.u32 1.1754944e-38, %v1726
        %v1728 = vsel %vm1725, %v1727, %v1723
        %v1729 = vmul.f32 1.0, %v1728
        %v1730 = vrcp.pop %v1638
        %v1731 = vmul.f32 %v1638, %v1730
        %v1732 = vsub.f32 1.0, %v1731
        %v1733 = vmul.f32 %v1730, %v1732
        %v1734 = vadd.f32 %v1730, %v1733
        %vm1735 = vweird.f32 %v1638
        %vm1736 = vweird.f32 %v1730
        %vm1737 = vmor %vm1735, %vm1736
        %v1738 = vsel %vm1737, %v1730, %v1734
        %v1739 = vand.u32 2147483647, %v1638
        %vm1740 = vcmp.eq.f32.partialorder %v1739, 8.507059e+37
        %v1741 = vand.u32 %v1638, 2147483648
        %v1742 = vor.u32 1.1754944e-38, %v1741
        %v1743 = vsel %vm1740, %v1742, %v1738
        %v1744 = vmul.f32 1.0, %v1743
        %v1745 = vrcp.pop %v1639
        %v1746 = vmul.f32 %v1639, %v1745
        %v1747 = vsub.f32 1.0, %v1746
        %v1748 = vmul.f32 %v1745, %v1747
        %v1749 = vadd.f32 %v1745, %v1748
        %vm1750 = vweird.f32 %v1639
        %vm1751 = vweird.f32 %v1745
        %vm1752 = vmor %vm1750, %vm1751
        %v1753 = vsel %vm1752, %v1745, %v1749
        %v1754 = vand.u32 2147483647, %v1639
        %vm1755 = vcmp.eq.f32.partialorder %v1754, 8.507059e+37
        %v1756 = vand.u32 %v1639, 2147483648
        %v1757 = vor.u32 1.1754944e-38, %v1756
        %v1758 = vsel %vm1755, %v1757, %v1753
        %v1759 = vmul.f32 1.0, %v1758
        %v1760 = vadd.f32 %v1486, %v445
        %v1761 = vadd.f32 %v1487, %v446
        %v1762 = vadd.f32 %v1488, %v447
        %v1763 = vadd.f32 %v1489, %v448
        %v1764 = vadd.f32 %v1490, %v449
        %v1765 = vadd.f32 %v1491, %v450
        %v1766 = vadd.f32 %v1492, %v451
        %v1767 = vadd.f32 %v1493, %v452
        %1768 = vadd.xlane.f32.xlu0 %v1760
        %v1769 = vpop.xlane.xlu0 %1768
        %1770 = vadd.xlane.f32.xlu0 %v1761
        %v1771 = vpop.xlane.xlu0 %1770
        %1772 = vadd.xlane.f32.xlu0 %v1762
        %v1773 = vpop.xlane.xlu0 %1772
        %1774 = vadd.xlane.f32.xlu0 %v1763
        %v1775 = vpop.xlane.xlu0 %1774
        %1776 = vadd.xlane.f32.xlu0 %v1764
        %v1777 = vpop.xlane.xlu0 %1776
        %1778 = vadd.xlane.f32.xlu0 %v1765
        %v1779 = vpop.xlane.xlu0 %1778
        %1780 = vadd.xlane.f32.xlu0 %v1766
        %v1781 = vpop.xlane.xlu0 %1780
        %1782 = vadd.xlane.f32.xlu0 %v1767
        %v1783 = vpop.xlane.xlu0 %1782
        %v1784 = vrcp.pop 128.0
        %v1785 = vmul.f32 128.0, %v1784
        %v1786 = vsub.f32 1.0, %v1785
        %v1787 = vmul.f32 %v1784, %v1786
        %v1788 = vadd.f32 %v1784, %v1787
        %vm1789 = vweird.f32 %v1784
        %v1790 = vsel %vm1789, %v1784, %v1788
        %v1791 = vmul.f32 %v1769, %v1790
        %v1792 = vmul.f32 %v1771, %v1790
        %v1793 = vmul.f32 %v1773, %v1790
        %v1794 = vmul.f32 %v1775, %v1790
        %v1795 = vmul.f32 %v1777, %v1790
        %v1796 = vmul.f32 %v1779, %v1790
        %v1797 = vmul.f32 %v1781, %v1790
        %v1798 = vmul.f32 %v1783, %v1790
        %v1799 = vsub.f32 %v1760, %v1791
        %v1800 = vsub.f32 %v1761, %v1792
        %v1801 = vsub.f32 %v1762, %v1793
        %v1802 = vsub.f32 %v1763, %v1794
        %v1803 = vsub.f32 %v1764, %v1795
        %v1804 = vsub.f32 %v1765, %v1796
        %v1805 = vsub.f32 %v1766, %v1797
        %v1806 = vsub.f32 %v1767, %v1798
        %v1807 = vmul.f32 %v1799, %v1799
        %v1808 = vmul.f32 %v1800, %v1800
        %v1809 = vmul.f32 %v1801, %v1801
        %v1810 = vmul.f32 %v1802, %v1802
        %v1811 = vmul.f32 %v1803, %v1803
        %v1812 = vmul.f32 %v1804, %v1804
        %v1813 = vmul.f32 %v1805, %v1805
        %v1814 = vmul.f32 %v1806, %v1806
        %1815 = vadd.xlane.f32.xlu0 %v1807
        %v1816 = vpop.xlane.xlu0 %1815
        %1817 = vadd.xlane.f32.xlu0 %v1808
        %v1818 = vpop.xlane.xlu0 %1817
        %1819 = vadd.xlane.f32.xlu0 %v1809
        %v1820 = vpop.xlane.xlu0 %1819
        %1821 = vadd.xlane.f32.xlu0 %v1810
        %v1822 = vpop.xlane.xlu0 %1821
        %1823 = vadd.xlane.f32.xlu0 %v1811
        %v1824 = vpop.xlane.xlu0 %1823
        %1825 = vadd.xlane.f32.xlu0 %v1812
        %v1826 = vpop.xlane.xlu0 %1825
        %1827 = vadd.xlane.f32.xlu0 %v1813
        %v1828 = vpop.xlane.xlu0 %1827
        %1829 = vadd.xlane.f32.xlu0 %v1814
        %v1830 = vpop.xlane.xlu0 %1829
        %v1831 = vmul.f32 %v1816, %v1790
        %v1832 = vmul.f32 %v1818, %v1790
        %v1833 = vmul.f32 %v1820, %v1790
        %v1834 = vmul.f32 %v1822, %v1790
        %v1835 = vmul.f32 %v1824, %v1790
        %v1836 = vmul.f32 %v1826, %v1790
        %v1837 = vmul.f32 %v1828, %v1790
        %v1838 = vmul.f32 %v1830, %v1790
        %v1839 = vadd.f32 %v1831, 1e-05
        %v1840 = vadd.f32 %v1832, 1e-05
        %v1841 = vadd.f32 %v1833, 1e-05
        %v1842 = vadd.f32 %v1834, 1e-05
        %v1843 = vadd.f32 %v1835, 1e-05
        %v1844 = vadd.f32 %v1836, 1e-05
        %v1845 = vadd.f32 %v1837, 1e-05
        %v1846 = vadd.f32 %v1838, 1e-05
        %v1847 = vrsqrt.pop %v1839
        %v1848 = vmul.f32 %v1847, %v1839
        %v1849 = vmul.f32 %v1848, %v1847
        %v1850 = vmul.f32 0.5, %v1849
        %v1851 = vsub.f32 1.5, %v1850
        %v1852 = vmul.f32 %v1847, %v1851
        %vm1853 = vweird.f32 %v1839
        %vm1854 = vweird.f32 %v1847
        %vm1855 = vmor %vm1853, %vm1854
        %v1856 = vsel %vm1855, %v1847, %v1852
        %v1857 = vrsqrt.pop %v1840
        %v1858 = vmul.f32 %v1857, %v1840
        %v1859 = vmul.f32 %v1858, %v1857
        %v1860 = vmul.f32 0.5, %v1859
        %v1861 = vsub.f32 1.5, %v1860
        %v1862 = vmul.f32 %v1857, %v1861
        %vm1863 = vweird.f32 %v1840
        %vm1864 = vweird.f32 %v1857
        %vm1865 = vmor %vm1863, %vm1864
        %v1866 = vsel %vm1865, %v1857, %v1862
        %v1867 = vrsqrt.pop %v1841
        %v1868 = vmul.f32 %v1867, %v1841
        %v1869 = vmul.f32 %v1868, %v1867
        %v1870 = vmul.f32 0.5, %v1869
        %v1871 = vsub.f32 1.5, %v1870
        %v1872 = vmul.f32 %v1867, %v1871
        %vm1873 = vweird.f32 %v1841
        %vm1874 = vweird.f32 %v1867
        %vm1875 = vmor %vm1873, %vm1874
        %v1876 = vsel %vm1875, %v1867, %v1872
        %v1877 = vrsqrt.pop %v1842
        %v1878 = vmul.f32 %v1877, %v1842
        %v1879 = vmul.f32 %v1878, %v1877
        %v1880 = vmul.f32 0.5, %v1879
        %v1881 = vsub.f32 1.5, %v1880
        %v1882 = vmul.f32 %v1877, %v1881
        %vm1883 = vweird.f32 %v1842
        %vm1884 = vweird.f32 %v1877
        %vm1885 = vmor %vm1883, %vm1884
        %v1886 = vsel %vm1885, %v1877, %v1882
        %v1887 = vrsqrt.pop %v1843
        %v1888 = vmul.f32 %v1887, %v1843
        %v1889 = vmul.f32 %v1888, %v1887
        %v1890 = vmul.f32 0.5, %v1889
        %v1891 = vsub.f32 1.5, %v1890
        %v1892 = vmul.f32 %v1887, %v1891
        %vm1893 = vweird.f32 %v1843
        %vm1894 = vweird.f32 %v1887
        %vm1895 = vmor %vm1893, %vm1894
        %v1896 = vsel %vm1895, %v1887, %v1892
        %v1897 = vrsqrt.pop %v1844
        %v1898 = vmul.f32 %v1897, %v1844
        %v1899 = vmul.f32 %v1898, %v1897
        %v1900 = vmul.f32 0.5, %v1899
        %v1901 = vsub.f32 1.5, %v1900
        %v1902 = vmul.f32 %v1897, %v1901
        %vm1903 = vweird.f32 %v1844
        %vm1904 = vweird.f32 %v1897
        %vm1905 = vmor %vm1903, %vm1904
        %v1906 = vsel %vm1905, %v1897, %v1902
        %v1907 = vrsqrt.pop %v1845
        %v1908 = vmul.f32 %v1907, %v1845
        %v1909 = vmul.f32 %v1908, %v1907
        %v1910 = vmul.f32 0.5, %v1909
        %v1911 = vsub.f32 1.5, %v1910
        %v1912 = vmul.f32 %v1907, %v1911
        %vm1913 = vweird.f32 %v1845
        %vm1914 = vweird.f32 %v1907
        %vm1915 = vmor %vm1913, %vm1914
        %v1916 = vsel %vm1915, %v1907, %v1912
        %v1917 = vrsqrt.pop %v1846
        %v1918 = vmul.f32 %v1917, %v1846
        %v1919 = vmul.f32 %v1918, %v1917
        %v1920 = vmul.f32 0.5, %v1919
        %v1921 = vsub.f32 1.5, %v1920
        %v1922 = vmul.f32 %v1917, %v1921
        %vm1923 = vweird.f32 %v1846
        %vm1924 = vweird.f32 %v1917
        %vm1925 = vmor %vm1923, %vm1924
        %v1926 = vsel %vm1925, %v1917, %v1922
        %v1927 = vmul.f32 %v1799, %v1856
        %v1928 = vmul.f32 %v1800, %v1866
        %v1929 = vmul.f32 %v1801, %v1876
        %v1930 = vmul.f32 %v1802, %v1886
        %v1931 = vmul.f32 %v1803, %v1896
        %v1932 = vmul.f32 %v1804, %v1906
        %v1933 = vmul.f32 %v1805, %v1916
        %v1934 = vmul.f32 %v1806, %v1926
        %v1935 = vperm.slane %v464, 0
        %v1936 = vmul.f32 %v1927, %v1935
        %v1937 = vmul.f32 %v1928, %v1935
        %v1938 = vmul.f32 %v1929, %v1935
        %v1939 = vmul.f32 %v1930, %v1935
        %v1940 = vmul.f32 %v1931, %v1935
        %v1941 = vmul.f32 %v1932, %v1935
        %v1942 = vmul.f32 %v1933, %v1935
        %v1943 = vmul.f32 %v1934, %v1935
        %v1944 = vperm.slane %v465, 0
        %v1945 = vadd.f32 %v1936, %v1944
        %v1946 = vadd.f32 %v1937, %v1944
        %v1947 = vadd.f32 %v1938, %v1944
        %v1948 = vadd.f32 %v1939, %v1944
        %v1949 = vadd.f32 %v1940, %v1944
        %v1950 = vadd.f32 %v1941, %v1944
        %v1951 = vadd.f32 %v1942, %v1944
        %v1952 = vadd.f32 %v1943, %v1944
        %v1953 = vmul.f32 %v1654, %v1945
        %v1954 = vmul.f32 %v1669, %v1946
        %v1955 = vmul.f32 %v1684, %v1947
        %v1956 = vmul.f32 %v1699, %v1948
        %v1957 = vmul.f32 %v1714, %v1949
        %v1958 = vmul.f32 %v1729, %v1950
        %v1959 = vmul.f32 %v1744, %v1951
        %v1960 = vmul.f32 %v1759, %v1952
        %v1961 = vsub.f32 1.0, %v1654
        %v1962 = vsub.f32 1.0, %v1669
        %v1963 = vsub.f32 1.0, %v1684
        %v1964 = vsub.f32 1.0, %v1699
        %v1965 = vsub.f32 1.0, %v1714
        %v1966 = vsub.f32 1.0, %v1729
        %v1967 = vsub.f32 1.0, %v1744
        %v1968 = vsub.f32 1.0, %v1759
        %v1969 = vmul.f32 %v1961, %v445
        %v1970 = vmul.f32 %v1962, %v446
        %v1971 = vmul.f32 %v1963, %v447
        %v1972 = vmul.f32 %v1964, %v448
        %v1973 = vmul.f32 %v1965, %v449
        %v1974 = vmul.f32 %v1966, %v450
        %v1975 = vmul.f32 %v1967, %v451
        %v1976 = vmul.f32 %v1968, %v452
        %v1977 = vadd.f32 %v1953, %v1969
        %v1978 = vadd.f32 %v1954, %v1970
        %v1979 = vadd.f32 %v1955, %v1971
        %v1980 = vadd.f32 %v1956, %v1972
        %v1981 = vadd.f32 %v1957, %v1973
        %v1982 = vadd.f32 %v1958, %v1974
        %v1983 = vadd.f32 %v1959, %v1975
        %v1984 = vadd.f32 %v1960, %v1976
        %1985 = vst [vmem:[#allocation2] sm:$0xff] %v1977
        %1986 = vst [vmem:[#allocation2 + $0x8] sm:$0xff] %v1978
        %1987 = vst [vmem:[#allocation2 + $0x10] sm:$0xff] %v1979
        %1988 = vst [vmem:[#allocation2 + $0x18] sm:$0xff] %v1980
        %1989 = vst [vmem:[#allocation2 + $0x20] sm:$0xff] %v1981
        %1990 = vst [vmem:[#allocation2 + $0x28] sm:$0xff] %v1982
        %1991 = vst [vmem:[#allocation2 + $0x30] sm:$0xff] %v1983
        %1992 = vst [vmem:[#allocation2 + $0x38] sm:$0xff] %v1984
        %1993 = vst [vmem:[%s421] sm:$0xff] %v1977
        %1994 = vst [vmem:[%s421 + $0x8] sm:$0xff] %v1978
        %1995 = vst [vmem:[%s421 + $0x10] sm:$0xff] %v1979
        %1996 = vst [vmem:[%s421 + $0x18] sm:$0xff] %v1980
        %1997 = vst [vmem:[%s421 + $0x20] sm:$0xff] %v1981
        %1998 = vst [vmem:[%s421 + $0x28] sm:$0xff] %v1982
        %1999 = vst [vmem:[%s421 + $0x30] sm:$0xff] %v1983
        %2000 = vst [vmem:[%s421 + $0x38] sm:$0xff] %v1984
        %s2001 = sand.u32 %s208, 1
        %s2002 = scalar_lea.sflag [#allocation5], %s2001
        %s2003 = sand.u32 %s208, 1
        %s2004 = smul.addr %s2003, 64
        %s2005 = scalar_lea.vmem [#allocation15], %s2004
        // Predicated region
        $region81: #{tpu_custom_call.1} parent=47 // pred_check
          %p2006 = pneg %p218
        $region82: #{tpu_custom_call.1} parent=47 // pred_check_branch
          %2008 = sbr.rel (%p2006) target = $region84
        $region83: #{tpu_custom_call.1} parent=47 // pred_region
          %s2009 = smul.u32 8, %s31
          %2011 = vsyncadd %s2002, 0
          %s2012 = smul.addr %s32, 8
          %s2013 = sadd.s32 %s2009, %s2012
          %s2014 = smul.addr %s2013, 8
          %s2015 = scalar_lea.hbm %s7, %s2014
          %s2016 = sshll.u32 %s2005, 4
          %s2017 = int_to_ptr.vmem [resolvable:$true] %s2016
          %s2018 = sshll.u32 %s2015, 4
          %s2019 = int_to_ptr.hbm [resolvable:$true] %s2018
          %2024 = dma.vmem_to_hbm [thread:$0]  %s2017, 1024, %s2019, %s2002, 128, 128, 8
        $region84: #{tpu_custom_call.1} parent=47 // pred_fallthru
          _
      $region48: #{tpu_custom_call.1} parent=5 // pred_fallthru
        _
      %p2025 = scmp.le.s32.totalorder 2, %s22
      // Predicated region
      $region85: #{tpu_custom_call.1} parent=5 // pred_check
        %p2026 = pneg %p2025
      $region86: #{tpu_custom_call.1} parent=5 // pred_check_branch
        %2028 = sbr.rel (%p2026) target = $region88
      $region87: #{tpu_custom_call.1} parent=5 // pred_region
        %s2029 = ssub.s32 %s22, 2
        // Predicated region
        $region89: #{tpu_custom_call.1} parent=87 // pred_check
          %p2030 = pneg %p224
        $region90: #{tpu_custom_call.1} parent=87 // pred_check_branch
          %2032 = sbr.rel (%p2030) target = $region92
        $region91: #{tpu_custom_call.1} parent=87 // pred_region
          %s2033 = sand.u32 %s209, 1
          %s2034 = scalar_lea.sflag [#allocation5], %s2033
          %s2035 = sand.u32 %s209, 1
          %s2036 = smul.addr %s2035, 64
          %s2037 = scalar_lea.vmem [#allocation15], %s2036
          %2039 = dma.done %s2034, 1024
        $region92: #{tpu_custom_call.1} parent=87 // pred_fallthru
          _
      $region88: #{tpu_custom_call.1} parent=5 // pred_fallthru
        _
    $region6: #{tpu_custom_call.1} parent=1 // loop_footer
      %s26 = sadd.s32 1, %s22
    $region7: #{tpu_custom_call.1} parent=1 // loop_footer_branch
      %21 = sbr.rel target = $region3
    $region8: #{tpu_custom_call.1} parent=1 // loop_exit
      _
    %2040 = vsyncpa [#allocation4], 1
    %s2041 = scalar_lea.sflag [#allocation4], 1
    %2042 = vsyncpa %s2041, 1
    %2043 = vsyncpa [#allocation7], 1
    %s2044 = scalar_lea.sflag [#allocation7], 1
    %2045 = vsyncpa %s2044, 1
    %2046 = vsyncpa [#allocation10], 1
    %2047 = vsyncpa [#allocation13], 1
    %2048 = vsyncpa [#allocation5], 1
    %s2049 = scalar_lea.sflag [#allocation5], 1
    %2050 = vsyncpa %s2049, 1

</llo_original>
